<compile_context>
chip_gen: v7x
topology: tpu7x:2x2x1
jax: 0.10.0
libtpu: 0.0.40
codegen_flags: <defaults>
</compile_context>

<pallas_src>
import numpy as np
import jax
import jax.numpy as jnp
from jax import lax
from jax.experimental import pallas as pl
from jax.experimental.pallas import tpu as pltpu


# ----------------------------- static config -------------------------------
DIM = 32                 # channels of x (and of y); z has 2*DIM channels
HEADS = 2
HEAD_DIM = 16
WINDOW_SIZE = 4
SHIFTED = True
RELATIVE_POS_EMBEDDING = True

B = 2
N_H = 8
N_W = 8

INNER_DIM = HEADS * HEAD_DIM
SCALE = HEAD_DIM ** (-0.5)
WS2 = WINDOW_SIZE * WINDOW_SIZE
NW_H = N_H // WINDOW_SIZE
NW_W = N_W // WINDOW_SIZE
NW = NW_H * NW_W
DISP = WINDOW_SIZE // 2
HW = N_H * N_W           # 64 spatial positions
NEG = -1e9               # finite "-inf" -> softmax stays NaN-safe


# -------------------- host-side (numpy) mask / index tables -----------------
def create_mask_np(window_size, displacement, upper_lower, left_right, neg=-np.inf):
    mask = np.zeros((window_size ** 2, window_size ** 2), dtype=np.float32)
    if upper_lower:
        mask[-displacement * window_size:, :-displacement * window_size] = neg
        mask[:-displacement * window_size, -displacement * window_size:] = neg
    if left_right:
        mask = mask.reshape(window_size, window_size, window_size, window_size)
        mask[:, -displacement:, :, :-displacement] = neg
        mask[:, :-displacement, :, -displacement:] = neg
        mask = mask.reshape(window_size ** 2, window_size ** 2)
    return mask


def get_relative_distances_np(window_size):
    indices = np.array([[x, y] for x in range(window_size) for y in range(window_size)])
    return indices[None, :, :] - indices[:, None, :]


_REL_IDX = get_relative_distances_np(WINDOW_SIZE) + WINDOW_SIZE - 1     # (WS2, WS2, 2)
_UL_MASK_INF = create_mask_np(WINDOW_SIZE, DISP, True, False)           # -inf (reference)
_LR_MASK_INF = create_mask_np(WINDOW_SIZE, DISP, False, True)
_UL_MASK_FIN = create_mask_np(WINDOW_SIZE, DISP, True, False, neg=NEG)  # finite (kernel)
_LR_MASK_FIN = create_mask_np(WINDOW_SIZE, DISP, False, True, neg=NEG)


def _build_dense_tables():
    """Fold cyclic shift + window structure + shift masks into dense (HW, HW) tables.

    Row p = original (un-shifted) spatial position of the query (q comes from x);
    column j = spatial position of the key/value (from y, never shifted).
    After the (-DISP,-DISP) roll, the query from original position p sits at shifted
    position i = ((p_h - DISP) % N_H, (p_w - DISP) % N_W); its window / in-window
    position are taken on that shifted grid, the key's on the un-shifted grid.  The
    inverse (+DISP,+DISP) roll of the output is automatically absorbed because the
    result row is already indexed by the original coordinate p.
    """
    rel_r = np.zeros((HW, HW), np.int32)
    rel_c = np.zeros((HW, HW), np.int32)
    valid = np.zeros((HW, HW), bool)
    add = np.zeros((HW, HW), np.float32)
    for p in range(HW):
        p_h, p_w = divmod(p, N_W)
        if SHIFTED:
            i_h, i_w = (p_h - DISP) % N_H, (p_w - DISP) % N_W
        else:
            i_h, i_w = p_h, p_w
        wq = (i_h // WINDOW_SIZE) * NW_W + (i_w // WINDOW_SIZE)
        a = (i_h % WINDOW_SIZE) * WINDOW_SIZE + (i_w % WINDOW_SIZE)
        for j in range(HW):
            j_h, j_w = divmod(j, N_W)
            wk = (j_h // WINDOW_SIZE) * NW_W + (j_w // WINDOW_SIZE)
            bpos = (j_h % WINDOW_SIZE) * WINDOW_SIZE + (j_w % WINDOW_SIZE)
            rel_r[p, j] = _REL_IDX[a, bpos, 0]
            rel_c[p, j] = _REL_IDX[a, bpos, 1]
            if wq == wk:
                valid[p, j] = True
                m = 0.0
                if SHIFTED:
                    if wq >= NW - NW_W:            # bottom row of windows
                        m += _UL_MASK_FIN[a, bpos]
                    if wq % NW_W == NW_W - 1:      # right column of windows
                        m += _LR_MASK_FIN[a, bpos]
                add[p, j] = m
    return rel_r, rel_c, valid, add


_D_REL_R, _D_REL_C, _D_VALID, _D_ADD = _build_dense_tables()


def build_dense_bias(pos_emb):
    """(HW, HW) additive attention bias in original spatial coordinates.

    Carries: relative-position bias, shift masks, cross-window -1e9 mask, and both
    cyclic rolls (folded in as a constant row re-indexing of the tables)."""
    # TODO(synk): only the relative-position-embedding variant is implemented
    # (RELATIVE_POS_EMBEDDING=True in the source configuration).
    pos = pos_emb[jnp.asarray(_D_REL_R), jnp.asarray(_D_REL_C)]          # (HW, HW)
    return jnp.where(jnp.asarray(_D_VALID), pos + jnp.asarray(_D_ADD),
                     jnp.float32(NEG)).astype(jnp.float32)


# ----------------------------- fused Pallas kernel ---------------------------
def _residual4_kernel(z_ref, w_ref, wout_ref, bout_ref, bias_ref, o_ref):
    # z_ref : (B*HW, 2*DIM) — both batches stacked along rows.
    z = z_ref[...]                                                   # (128, 64)

    # Combined projection: rows [:DIM] act on x -> Q (pre-scaled), rows [DIM:] act on
    # y -> K,V.  Zero padding in w_ref implements the x/y split without lane slicing z.
    qkv = jnp.dot(z, w_ref[...], preferred_element_type=jnp.float32)  # (128, 96)
    q_all = qkv[:, :INNER_DIM]
    k_all = qkv[:, INNER_DIM:2 * INNER_DIM]
    v_all = qkv[:, 2 * INNER_DIM:]

    bias = bias_ref[...]        # (B*HW, B*HW): pos bias + shift/window/batch masks

    head_outs = []
    for h in range(HEADS):      # static unroll (HEADS == 2)
        sl = slice(h * HEAD_DIM, (h + 1) * HEAD_DIM)
        qh, kh, vh = q_all[:, sl], k_all[:, sl], v_all[:, sl]
        s = lax.dot_general(qh, kh, (((1,), (1,)), ((), ())),
                            preferred_element_type=jnp.float32)      # (128,128) = q@k^T
        s = s + bias
        m = jnp.max(s, axis=-1, keepdims=True)
        p = jnp.exp(s - m)
        attn = p / jnp.sum(p, axis=-1, keepdims=True)
        head_outs.append(jnp.dot(attn, vh, preferred_element_type=jnp.float32))
    attn_out = jnp.concatenate(head_outs, axis=-1)                    # (128, INNER_DIM)

    out = jnp.dot(attn_out, wout_ref[...],
                  preferred_element_type=jnp.float32) + bout_ref[...]  # (128, DIM)

    # fn(z) = concat([attention(x, y), y]);  Residual4: fn(z) + z
    x = z[:, :DIM]
    y = z[:, DIM:]
    o_ref[...] = jnp.concatenate([out + x, y + y], axis=-1).astype(o_ref.dtype)


def residual4_forward(z, params):
    b = z.shape[0]
    rows = b * HW
    z_flat = z.reshape(rows, 2 * DIM)                    # contiguous row-major reshape

    # Dense per-batch bias, then block-diagonal over batches (cross-batch = -1e9).
    bias64 = build_dense_bias(params["pos_emb"])         # (HW, HW) f32
    bias = jnp.full((rows, rows), jnp.float32(NEG))
    for i in range(b):
        bias = lax.dynamic_update_slice(bias, bias64, (i * HW, i * HW))

    # Combined, zero-padded projection weight; fold 1/sqrt(d) into the Q columns.
    w_q = params["w_qkv"][:, :INNER_DIM] * jnp.float32(SCALE)          # (DIM, INNER_DIM)
    w_kv = params["w_qkv"][:, INNER_DIM:]                              # (DIM, 2*INNER_DIM)
    w_comb = jnp.concatenate(
        [jnp.concatenate([w_q, jnp.zeros((DIM, 2 * INNER_DIM), jnp.float32)], axis=1),
         jnp.concatenate([jnp.zeros((DIM, INNER_DIM), jnp.float32), w_kv], axis=1)],
        axis=0)                                                        # (2*DIM, 3*INNER_DIM)

    bout = params["b_out"].reshape(1, DIM)

    out = pl.pallas_call(
        _residual4_kernel,
        out_shape=jax.ShapeDtypeStruct((rows, 2 * DIM), z.dtype),
        grid=(1,),
        in_specs=[
            pl.BlockSpec((rows, 2 * DIM), lambda i: (0, 0)),
            pl.BlockSpec((2 * DIM, 3 * INNER_DIM), lambda i: (0, 0)),
            pl.BlockSpec((INNER_DIM, DIM), lambda i: (0, 0)),
            pl.BlockSpec((1, DIM), lambda i: (0, 0)),
            pl.BlockSpec((rows, rows), lambda i: (0, 0)),
        ],
        out_specs=pl.BlockSpec((rows, 2 * DIM), lambda i: (0, 0)),
        compiler_params=pltpu.CompilerParams(
            dimension_semantics=("arbitrary",)),
    )(z_flat, w_comb, params["w_out"], bout, bias)
    return out.reshape(b, N_H, N_W, 2 * DIM)


# ----------------------------- pure-JAX reference ----------------------------
def to_windows(t):
    # 'b (nw_h w_h) (nw_w w_w) (h d) -> b h (nw_h nw_w) (w_h w_w) d'
    b = t.shape[0]
    t = t.reshape(b, NW_H, WINDOW_SIZE, NW_W, WINDOW_SIZE, HEADS, HEAD_DIM)
    t = t.transpose(0, 5, 1, 3, 2, 4, 6)
    return t.reshape(b, HEADS, NW, WS2, HEAD_DIM)


def from_windows(t):
    # 'b h (nw_h nw_w) (w_h w_w) d -> b (nw_h w_h) (nw_w w_w) (h d)'
    b = t.shape[0]
    t = t.reshape(b, HEADS, NW_H, NW_W, WINDOW_SIZE, WINDOW_SIZE, HEAD_DIM)
    t = t.transpose(0, 2, 4, 3, 5, 1, 6)
    return t.reshape(b, N_H, N_W, INNER_DIM)


def build_bias_windows(pos_emb):
    pos_bias = pos_emb[_REL_IDX[:, :, 0], _REL_IDX[:, :, 1]]        # (WS2, WS2)
    bias = jnp.broadcast_to(pos_bias, (NW, WS2, WS2)).astype(jnp.float32)
    if SHIFTED:
        bias = bias.at[-NW_W:].add(jnp.asarray(_UL_MASK_INF))
        bias = bias.at[NW_W - 1::NW_W].add(jnp.asarray(_LR_MASK_INF))
    return bias


def reference_forward(z, params):
    x = z[..., :DIM]
    y = z[..., DIM:]
    xs = jnp.roll(x, shift=(-DISP, -DISP), axis=(1, 2)) if SHIFTED else x
    qkv_x = xs @ params["w_qkv"]
    qkv_y = y @ params["w_qkv"]
    q = to_windows(qkv_x[..., :INNER_DIM])
    K = to_windows(qkv_y[..., INNER_DIM:2 * INNER_DIM])
    V = to_windows(qkv_y[..., 2 * INNER_DIM:])
    dots = jnp.einsum("bhwid,bhwjd->bhwij", q, K) * SCALE
    dots = dots + build_bias_windows(params["pos_emb"])
    attn = jax.nn.softmax(dots, axis=-1)
    out = jnp.einsum("bhwij,bhwjd->bhwid", attn, V)
    out = from_windows(out)
    out = out @ params["w_out"] + params["b_out"]
    if SHIFTED:
        out = jnp.roll(out, shift=(DISP, DISP), axis=(1, 2))
    fn_out = jnp.concatenate([out, y], axis=3)
    return fn_out + z                                    # Residual4: fn(z) + z


# ----------------------------- params & main ---------------------------------
def init_params(key):
    k1, k2, k3, k4 = jax.random.split(key, 4)
    return {
        "w_qkv": jax.random.normal(k1, (DIM, 3 * INNER_DIM), jnp.float32) * 0.02,
        "w_out": jax.random.normal(k2, (INNER_DIM, DIM), jnp.float32) * 0.02,
        "b_out": jax.random.normal(k3, (DIM,), jnp.float32) * 0.02,
        "pos_emb": jax.random.normal(
            k4, (2 * WINDOW_SIZE - 1, 2 * WINDOW_SIZE - 1), jnp.float32),
    }


if __name__ == "__main__":
    key = jax.random.PRNGKey(0)
    kp, kz = jax.random.split(key)
    params = init_params(kp)
    z = jax.random.normal(kz, (B, N_H, N_W, 2 * DIM), jnp.float32)

    out = jax.block_until_ready(jax.jit(residual4_forward)(z, params))
    ref = reference_forward(z, params)
    assert out.shape == (B, N_H, N_W, 2 * DIM), out.shape
    np.testing.assert_allclose(np.asarray(out), np.asarray(ref),
                               rtol=1e-4, atol=1e-4)
    print("KERNEL_OK")
</pallas_src>

<mosaic_0001>
module attributes {stable_mosaic.version = 11 : i64} {
  func.func @_residual4_kernel(%arg0: i32, %arg1: memref<128x64xf32, #tpu.memory_space<vmem>>, %arg2: memref<64x96xf32, #tpu.memory_space<vmem>>, %arg3: memref<32x32xf32, #tpu.memory_space<vmem>>, %arg4: memref<1x32xf32, #tpu.memory_space<vmem>>, %arg5: memref<128x128xf32, #tpu.memory_space<vmem>>, %arg6: memref<128x64xf32, #tpu.memory_space<vmem>>) attributes {dimension_semantics = [#tpu.dimension_semantics<arbitrary>], iteration_bounds = array<i64: 1>, scalar_prefetch = 0 : i64, scratch_operands = 0 : i64, tpu.core_type = #tpu.core_type<tc>, window_params = [{pipeline_mode = #tpu.pipeline_mode<synchronous>, transform_indices = @transform_0, window_bounds = array<i64: 128, 64>}, {pipeline_mode = #tpu.pipeline_mode<synchronous>, transform_indices = @transform_1, window_bounds = array<i64: 64, 96>}, {pipeline_mode = #tpu.pipeline_mode<synchronous>, transform_indices = @transform_2, window_bounds = array<i64: 32, 32>}, {pipeline_mode = #tpu.pipeline_mode<synchronous>, transform_indices = @transform_3, window_bounds = array<i64: 1, 32>}, {pipeline_mode = #tpu.pipeline_mode<synchronous>, transform_indices = @transform_4, window_bounds = array<i64: 128, 128>}, {pipeline_mode = #tpu.pipeline_mode<synchronous>, transform_indices = @transform_5, window_bounds = array<i64: 128, 64>}]} {
    %c0 = arith.constant 0 : index
    %c0_0 = arith.constant 0 : index
    %0 = vector.load %arg1[%c0, %c0_0] : memref<128x64xf32, #tpu.memory_space<vmem>>, vector<128x64xf32>
    %c0_1 = arith.constant 0 : index
    %c0_2 = arith.constant 0 : index
    %1 = vector.load %arg2[%c0_1, %c0_2] : memref<64x96xf32, #tpu.memory_space<vmem>>, vector<64x96xf32>
    %cst = arith.constant dense<0.000000e+00> : vector<128x96xf32>
    %2 = tpu.matmul %0, %1, %cst {dimension_numbers = #tpu.dot_dimension_numbers<[1], [0], [0], [1], [0, 0, 1, 1], [], []>} : vector<128x64xf32>, vector<64x96xf32>, vector<128x96xf32> -> vector<128x96xf32>
    %3 = vector.extract_strided_slice %2 {offsets = [0, 0], sizes = [128, 32], strides = [1, 1]} : vector<128x96xf32> to vector<128x32xf32>
    %4 = vector.extract_strided_slice %2 {offsets = [0, 32], sizes = [128, 32], strides = [1, 1]} : vector<128x96xf32> to vector<128x32xf32>
    %5 = vector.extract_strided_slice %2 {offsets = [0, 64], sizes = [128, 32], strides = [1, 1]} : vector<128x96xf32> to vector<128x32xf32>
    %c0_3 = arith.constant 0 : index
    %c0_4 = arith.constant 0 : index
    %6 = vector.load %arg5[%c0_3, %c0_4] : memref<128x128xf32, #tpu.memory_space<vmem>>, vector<128x128xf32>
    %7 = vector.extract_strided_slice %3 {offsets = [0, 0], sizes = [128, 16], strides = [1, 1]} : vector<128x32xf32> to vector<128x16xf32>
    %8 = vector.extract_strided_slice %4 {offsets = [0, 0], sizes = [128, 16], strides = [1, 1]} : vector<128x32xf32> to vector<128x16xf32>
    %9 = vector.extract_strided_slice %5 {offsets = [0, 0], sizes = [128, 16], strides = [1, 1]} : vector<128x32xf32> to vector<128x16xf32>
    %cst_5 = arith.constant dense<0.000000e+00> : vector<128x128xf32>
    %10 = tpu.matmul %7, %8, %cst_5 {dimension_numbers = #tpu.dot_dimension_numbers<[1], [1], [0], [0], [0, 0, 1, 0], [], []>} : vector<128x16xf32>, vector<128x16xf32>, vector<128x128xf32> -> vector<128x128xf32>
    %11 = arith.addf %10, %6 : vector<128x128xf32>
    %cst_6 = arith.constant dense<0xFF800000> : vector<128xf32>
    %12 = vector.multi_reduction <maximumf>, %11, %cst_6 [1] : vector<128x128xf32> to vector<128xf32>
    %13 = vector.shape_cast %12 : vector<128xf32> to vector<128x1xf32>
    %14 = vector.broadcast %13 : vector<128x1xf32> to vector<128x128xf32>
    %15 = arith.subf %11, %14 : vector<128x128xf32>
    %16 = math.exp %15 : vector<128x128xf32>
    %cst_7 = arith.constant dense<0.000000e+00> : vector<128xf32>
    %17 = vector.multi_reduction <add>, %16, %cst_7 [1] : vector<128x128xf32> to vector<128xf32>
    %18 = vector.shape_cast %17 : vector<128xf32> to vector<128x1xf32>
    %19 = vector.broadcast %18 : vector<128x1xf32> to vector<128x128xf32>
    %20 = arith.divf %16, %19 : vector<128x128xf32>
    %cst_8 = arith.constant dense<0.000000e+00> : vector<128x16xf32>
    %21 = tpu.matmul %20, %9, %cst_8 {dimension_numbers = #tpu.dot_dimension_numbers<[1], [0], [0], [1], [0, 0, 1, 1], [], []>} : vector<128x128xf32>, vector<128x16xf32>, vector<128x16xf32> -> vector<128x16xf32>
    %22 = vector.extract_strided_slice %3 {offsets = [0, 16], sizes = [128, 16], strides = [1, 1]} : vector<128x32xf32> to vector<128x16xf32>
    %23 = vector.extract_strided_slice %4 {offsets = [0, 16], sizes = [128, 16], strides = [1, 1]} : vector<128x32xf32> to vector<128x16xf32>
    %24 = vector.extract_strided_slice %5 {offsets = [0, 16], sizes = [128, 16], strides = [1, 1]} : vector<128x32xf32> to vector<128x16xf32>
    %cst_9 = arith.constant dense<0.000000e+00> : vector<128x128xf32>
    %25 = tpu.matmul %22, %23, %cst_9 {dimension_numbers = #tpu.dot_dimension_numbers<[1], [1], [0], [0], [0, 0, 1, 0], [], []>} : vector<128x16xf32>, vector<128x16xf32>, vector<128x128xf32> -> vector<128x128xf32>
    %26 = arith.addf %25, %6 : vector<128x128xf32>
    %cst_10 = arith.constant dense<0xFF800000> : vector<128xf32>
    %27 = vector.multi_reduction <maximumf>, %26, %cst_10 [1] : vector<128x128xf32> to vector<128xf32>
    %28 = vector.shape_cast %27 : vector<128xf32> to vector<128x1xf32>
    %29 = vector.broadcast %28 : vector<128x1xf32> to vector<128x128xf32>
    %30 = arith.subf %26, %29 : vector<128x128xf32>
    %31 = math.exp %30 : vector<128x128xf32>
    %cst_11 = arith.constant dense<0.000000e+00> : vector<128xf32>
    %32 = vector.multi_reduction <add>, %31, %cst_11 [1] : vector<128x128xf32> to vector<128xf32>
    %33 = vector.shape_cast %32 : vector<128xf32> to vector<128x1xf32>
    %34 = vector.broadcast %33 : vector<128x1xf32> to vector<128x128xf32>
    %35 = arith.divf %31, %34 : vector<128x128xf32>
    %cst_12 = arith.constant dense<0.000000e+00> : vector<128x16xf32>
    %36 = tpu.matmul %35, %24, %cst_12 {dimension_numbers = #tpu.dot_dimension_numbers<[1], [0], [0], [1], [0, 0, 1, 1], [], []>} : vector<128x128xf32>, vector<128x16xf32>, vector<128x16xf32> -> vector<128x16xf32>
    %37 = tpu.concatenate %21, %36 in 1 : vector<128x16xf32>, vector<128x16xf32> -> vector<128x32xf32>
    %c0_13 = arith.constant 0 : index
    %c0_14 = arith.constant 0 : index
    %38 = vector.load %arg3[%c0_13, %c0_14] : memref<32x32xf32, #tpu.memory_space<vmem>>, vector<32x32xf32>
    %cst_15 = arith.constant dense<0.000000e+00> : vector<128x32xf32>
    %39 = tpu.matmul %37, %38, %cst_15 {dimension_numbers = #tpu.dot_dimension_numbers<[1], [0], [0], [1], [0, 0, 1, 1], [], []>} : vector<128x32xf32>, vector<32x32xf32>, vector<128x32xf32> -> vector<128x32xf32>
    %c0_16 = arith.constant 0 : index
    %c0_17 = arith.constant 0 : index
    %40 = vector.load %arg4[%c0_16, %c0_17] : memref<1x32xf32, #tpu.memory_space<vmem>>, vector<1x32xf32>
    %41 = vector.broadcast %40 : vector<1x32xf32> to vector<128x32xf32>
    %42 = arith.addf %39, %41 : vector<128x32xf32>
    %43 = vector.extract_strided_slice %0 {offsets = [0, 0], sizes = [128, 32], strides = [1, 1]} : vector<128x64xf32> to vector<128x32xf32>
    %44 = vector.extract_strided_slice %0 {offsets = [0, 32], sizes = [128, 32], strides = [1, 1]} : vector<128x64xf32> to vector<128x32xf32>
    %45 = arith.addf %42, %43 : vector<128x32xf32>
    %46 = arith.addf %44, %44 : vector<128x32xf32>
    %47 = tpu.concatenate %45, %46 in 1 : vector<128x32xf32>, vector<128x32xf32> -> vector<128x64xf32>
    %c0_18 = arith.constant 0 : index
    %c0_19 = arith.constant 0 : index
    %48 = vector.load %arg6[%c0_18, %c0_19] : memref<128x64xf32, #tpu.memory_space<vmem>>, vector<128x64xf32>
    tpu.vector_store %arg6[%c0_18, %c0_19], %47 {strides = array<i32>} : memref<128x64xf32, #tpu.memory_space<vmem>>, vector<128x64xf32>,
    return
  }
  func.func @transform_0(%arg0: i32) -> (i32, i32) {
    %c0_i32 = arith.constant 0 : i32
    %c0_i32_0 = arith.constant 0 : i32
    %c0_i32_1 = arith.constant 0 : i32
    return %c0_i32, %c0_i32_0 : i32, i32
  }
  func.func @transform_1(%arg0: i32) -> (i32, i32) {
    %c0_i32 = arith.constant 0 : i32
    %c0_i32_0 = arith.constant 0 : i32
    %c0_i32_1 = arith.constant 0 : i32
    return %c0_i32, %c0_i32_0 : i32, i32
  }
  func.func @transform_2(%arg0: i32) -> (i32, i32) {
    %c0_i32 = arith.constant 0 : i32
    %c0_i32_0 = arith.constant 0 : i32
    %c0_i32_1 = arith.constant 0 : i32
    return %c0_i32, %c0_i32_0 : i32, i32
  }
  func.func @transform_3(%arg0: i32) -> (i32, i32) {
    %c0_i32 = arith.constant 0 : i32
    %c0_i32_0 = arith.constant 0 : i32
    %c0_i32_1 = arith.constant 0 : i32
    return %c0_i32, %c0_i32_0 : i32, i32
  }
  func.func @transform_4(%arg0: i32) -> (i32, i32) {
    %c0_i32 = arith.constant 0 : i32
    %c0_i32_0 = arith.constant 0 : i32
    %c0_i32_1 = arith.constant 0 : i32
    return %c0_i32, %c0_i32_0 : i32, i32
  }
  func.func @transform_5(%arg0: i32) -> (i32, i32) {
    %c0_i32 = arith.constant 0 : i32
    %c0_i32_0 = arith.constant 0 : i32
    %c0_i32_1 = arith.constant 0 : i32
    return %c0_i32, %c0_i32_0 : i32, i32
  }
}

</mosaic_0001>

<llo_original>
// kernel: residual4_forward.1
$region0: #{residual4_forward.1}
  #allocation0 [shape = 'u32[]', space=smem, size = 0x4, offset = 0x4, fixed_abs, tag = 'smem constant byte address 0x4 - core index']
  #allocation1 [shape = 'u32[144,128]{1,0:T(1,128)}', space=vmem, size = 0x12000, scoped, tag = 'internal scratch']
  %s0 = inlined_call_operand.vmem [shape: f32[128,64], index: 0, kind: input, shape index: {}]
  %s1 = inlined_call_operand.vmem [shape: f32[64,96], index: 1, kind: input, shape index: {}]
  %s2 = inlined_call_operand.vmem [shape: f32[32,32], index: 2, kind: input, shape index: {}]
  %s3 = inlined_call_operand.vmem [shape: f32[1,32], index: 3, kind: input, shape index: {}]
  %s4 = inlined_call_operand.vmem [shape: f32[128,128], index: 4, kind: input, shape index: {}]
  %s5 = inlined_call_operand.hbm [shape: f32[128,64], index: 5, kind: output, shape index: {}]
  %s6 = sld [smem:[#allocation0]]
  $region30: #{residual4_forward.1} parent=0
    _
  %s8 = ssub.s32 1, %s6
  %s9 = scalar_select 0, %s8, %s6
  $region1: #{residual4_forward.1} parent=0
    #allocation2 [shape = 'u8[65536]{0}', space=vmem, size = 0x10000, scoped, tag = 'output window, operand 0, single buffered']
    #allocation3 [shape = 's32[1]{0}', space=sflag, size = 0x4, scoped, tag = 'scoped memory for residual4_forward.1']
    %10 = vsyncpa [#allocation3], 0
    // Predicated region
    $region2: #{residual4_forward.1} parent=1 // pred_check
      _
    $region3: #{residual4_forward.1} parent=1 // pred_check_branch
      %12 = sbr.rel (0) target = $region5
    $region4: #{residual4_forward.1} parent=1 // pred_region
      _
    $region5: #{residual4_forward.1} parent=1 // pred_fallthru
      _
    // Predicated region
    $region6: #{residual4_forward.1} parent=1 // pred_check
      _
    $region7: #{residual4_forward.1} parent=1 // pred_check_branch
      %14 = sbr.rel (0) target = $region9
    $region8: #{residual4_forward.1} parent=1 // pred_region
      _
    $region9: #{residual4_forward.1} parent=1 // pred_fallthru
      _
    // Predicated region
    $region10: #{residual4_forward.1} parent=1 // pred_check
      _
    $region11: #{residual4_forward.1} parent=1 // pred_check_branch
      %16 = sbr.rel (0) target = $region13
    $region12: #{residual4_forward.1} parent=1 // pred_region
      _
    $region13: #{residual4_forward.1} parent=1 // pred_fallthru
      _
    // Predicated region
    $region14: #{residual4_forward.1} parent=1 // pred_check
      _
    $region15: #{residual4_forward.1} parent=1 // pred_check_branch
      %18 = sbr.rel (0) target = $region17
    $region16: #{residual4_forward.1} parent=1 // pred_region
      _
    $region17: #{residual4_forward.1} parent=1 // pred_fallthru
      _
    // Predicated region
    $region18: #{residual4_forward.1} parent=1 // pred_check
      _
    $region19: #{residual4_forward.1} parent=1 // pred_check_branch
      %20 = sbr.rel (0) target = $region21
    $region20: #{residual4_forward.1} parent=1 // pred_region
      _
    $region21: #{residual4_forward.1} parent=1 // pred_fallthru
      _
    %v21 = vld [vmem:[%s0] sm:$0xff]
    %v22 = vld [vmem:[%s0 + $0x8] sm:$0xff]
    %v23 = vld [vmem:[%s0 + $0x10] sm:$0xff]
    %v24 = vld [vmem:[%s0 + $0x18] sm:$0xff]
    %v25 = vld [vmem:[%s0 + $0x20] sm:$0xff]
    %v26 = vld [vmem:[%s0 + $0x28] sm:$0xff]
    %v27 = vld [vmem:[%s0 + $0x30] sm:$0xff]
    %v28 = vld [vmem:[%s0 + $0x38] sm:$0xff]
    %v29 = vld [vmem:[%s0 + $0x40] sm:$0xff]
    %v30 = vld [vmem:[%s0 + $0x48] sm:$0xff]
    %v31 = vld [vmem:[%s0 + $0x50] sm:$0xff]
    %v32 = vld [vmem:[%s0 + $0x58] sm:$0xff]
    %v33 = vld [vmem:[%s0 + $0x60] sm:$0xff]
    %v34 = vld [vmem:[%s0 + $0x68] sm:$0xff]
    %v35 = vld [vmem:[%s0 + $0x70] sm:$0xff]
    %v36 = vld [vmem:[%s0 + $0x78] sm:$0xff]
    %v37 = vld [vmem:[%s1] sm:$0xff]
    %v38 = vld [vmem:[%s1 + $0x8] sm:$0xff]
    %v39 = vld [vmem:[%s1 + $0x10] sm:$0xff]
    %v40 = vld [vmem:[%s1 + $0x18] sm:$0xff]
    %v41 = vld [vmem:[%s1 + $0x20] sm:$0xff]
    %v42 = vld [vmem:[%s1 + $0x28] sm:$0xff]
    %v43 = vld [vmem:[%s1 + $0x30] sm:$0xff]
    %v44 = vld [vmem:[%s1 + $0x38] sm:$0xff]
    %vm45 = vcmask 523264
    %v47 = vsel %vm45, %v21, 0
    %v50 = vsel %vm45, %v22, 0
    %v53 = vsel %vm45, %v23, 0
    %v56 = vsel %vm45, %v24, 0
    %v59 = vsel %vm45, %v25, 0
    %v62 = vsel %vm45, %v26, 0
    %v65 = vsel %vm45, %v27, 0
    %v68 = vsel %vm45, %v28, 0
    %v71 = vsel %vm45, %v29, 0
    %v74 = vsel %vm45, %v30, 0
    %v77 = vsel %vm45, %v31, 0
    %v80 = vsel %vm45, %v32, 0
    %v83 = vsel %vm45, %v33, 0
    %v86 = vsel %vm45, %v34, 0
    %v89 = vsel %vm45, %v35, 0
    %v92 = vsel %vm45, %v36, 0
    %94 = vmatprep.subr.mxu0 0.0
    %95 = vmatpush1.msra.mxu0 %v37
    %96 = vmatprep.subr.mxu0 0.0
    %97 = vmatpush1.msra.mxu0 %v38
    %98 = vmatprep.subr.mxu0 0.0
    %99 = vmatpush1.msra.mxu0 %v39
    %100 = vmatprep.subr.mxu0 0.0
    %101 = vmatpush1.msra.mxu0 %v40
    %102 = vmatprep.subr.mxu0 0.0
    %103 = vmatpush1.msra.mxu0 %v41
    %104 = vmatprep.subr.mxu0 0.0
    %105 = vmatpush1.msra.mxu0 %v42
    %106 = vmatprep.subr.mxu0 0.0
    %107 = vmatpush1.msra.mxu0 %v43
    %108 = vmatprep.subr.mxu0 0.0
    %109 = vmatpush1.msra.mxu0 %v44
    %110 = vmatprep.subr.mxu0 0.0
    %111 = vmatpush1.msra.mxu0 0.0
    %112 = vmatprep.subr.mxu0 0.0
    %113 = vmatpush1.msra.mxu0 0.0
    %114 = vmatprep.subr.mxu0 0.0
    %115 = vmatpush1.msra.mxu0 0.0
    %116 = vmatprep.subr.mxu0 0.0
    %117 = vmatpush1.msra.mxu0 0.0
    %118 = vmatprep.subr.mxu0 0.0
    %119 = vmatpush1.msra.mxu0 0.0
    %120 = vmatprep.subr.mxu0 0.0
    %121 = vmatpush1.msra.mxu0 0.0
    %122 = vmatprep.subr.mxu0 0.0
    %123 = vmatpush1.msra.mxu0 0.0
    %124 = vmatprep.subr.mxu0 0.0
    %125 = vmatpush1.msra.mxu0 0.0
    %126 = vmatprep.subr.mxu0 0.0
    %127 = vmatpush1.msra.mxu0 0.0
    %128 = vmatprep.subr.mxu0 0.0
    %129 = vmatpush1.msra.mxu0 0.0
    %130 = vmatprep.subr.mxu0 0.0
    %131 = vmatpush1.msra.mxu0 0.0
    %132 = vmatprep.subr.mxu0 0.0
    %133 = vmatpush1.msra.mxu0 0.0
    %134 = vmatprep.subr.mxu0 0.0
    %135 = vmatpush1.msra.mxu0 0.0
    %136 = vmatprep.subr.mxu0 0.0
    %137 = vmatpush1.msra.mxu0 0.0
    %138 = vmatprep.subr.mxu0 0.0
    %139 = vmatpush1.msra.mxu0 0.0
    %140 = vmatprep.subr.mxu0 0.0
    %141 = vmatpush1.msra.mxu0 0.0
    %142 = vmatprep.subr.mxu0 0.0
    %143 = vmatpush1.msra.mxu0 0.0
    %144 = vmatprep.subr.mxu0 0.0
    %145 = vmatpush1.msra.mxu0 0.0
    %146 = vmatprep.subr.mxu0 0.0
    %147 = vmatpush1.msra.mxu0 0.0
    %148 = vmatprep.subr.mxu0 0.0
    %149 = vmatpush1.msra.mxu0 0.0
    %150 = vmatprep.subr.mxu0 0.0
    %151 = vmatpush1.msra.mxu0 0.0
    %152 = vmatprep.subr.mxu0 0.0
    %153 = vmatpush1.msra.mxu0 0.0
    %154 = vmatprep.subr.mxu0 0.0
    %155 = vmatpush1.msra.mxu0 0.0
    %156 = vmatprep.subr.mxu0 0.0
    %157 = vmatpush1.msra.mxu0 0.0
    %158 = vmatprep.mubr.f32.mxu0 0.0
    %159 = vmatmul.mubr.f32.gmra.mrb[0].mxu0 %v47
    %v160 = vpop.f32.mrb[0].mxu0
    %v161 = vadd.f32 0.0, %v160
    %v162 = vpop.f32.mrb[0].mxu0
    %163 = vmatprep.mubr.f32.mxu0 0.0
    %164 = vmatmul.mubr.f32.gmra.mrb[0].mxu0 %v50
    %v165 = vpop.f32.mrb[0].mxu0
    %v166 = vadd.f32 0.0, %v165
    %v167 = vpop.f32.mrb[0].mxu0
    %168 = vmatprep.mubr.f32.mxu0 0.0
    %169 = vmatmul.mubr.f32.gmra.mrb[0].mxu0 %v53
    %v170 = vpop.f32.mrb[0].mxu0
    %v171 = vadd.f32 0.0, %v170
    %v172 = vpop.f32.mrb[0].mxu0
    %173 = vmatprep.mubr.f32.mxu0 0.0
    %174 = vmatmul.mubr.f32.gmra.mrb[0].mxu0 %v56
    %v175 = vpop.f32.mrb[0].mxu0
    %v176 = vadd.f32 0.0, %v175
    %v177 = vpop.f32.mrb[0].mxu0
    %178 = vmatprep.mubr.f32.mxu0 0.0
    %179 = vmatmul.mubr.f32.gmra.mrb[0].mxu0 %v59
    %v180 = vpop.f32.mrb[0].mxu0
    %v181 = vadd.f32 0.0, %v180
    %v182 = vpop.f32.mrb[0].mxu0
    %183 = vmatprep.mubr.f32.mxu0 0.0
    %184 = vmatmul.mubr.f32.gmra.mrb[0].mxu0 %v62
    %v185 = vpop.f32.mrb[0].mxu0
    %v186 = vadd.f32 0.0, %v185
    %v187 = vpop.f32.mrb[0].mxu0
    %188 = vmatprep.mubr.f32.mxu0 0.0
    %189 = vmatmul.mubr.f32.gmra.mrb[0].mxu0 %v65
    %v190 = vpop.f32.mrb[0].mxu0
    %v191 = vadd.f32 0.0, %v190
    %v192 = vpop.f32.mrb[0].mxu0
    %193 = vmatprep.mubr.f32.mxu0 0.0
    %194 = vmatmul.mubr.f32.gmra.mrb[0].mxu0 %v68
    %v195 = vpop.f32.mrb[0].mxu0
    %v196 = vadd.f32 0.0, %v195
    %v197 = vpop.f32.mrb[0].mxu0
    %198 = vmatprep.mubr.f32.mxu0 0.0
    %199 = vmatmul.mubr.f32.gmra.mrb[0].mxu0 %v71
    %v200 = vpop.f32.mrb[0].mxu0
    %v201 = vadd.f32 0.0, %v200
    %v202 = vpop.f32.mrb[0].mxu0
    %203 = vmatprep.mubr.f32.mxu0 0.0
    %204 = vmatmul.mubr.f32.gmra.mrb[0].mxu0 %v74
    %v205 = vpop.f32.mrb[0].mxu0
    %v206 = vadd.f32 0.0, %v205
    %v207 = vpop.f32.mrb[0].mxu0
    %208 = vmatprep.mubr.f32.mxu0 0.0
    %209 = vmatmul.mubr.f32.gmra.mrb[0].mxu0 %v77
    %v210 = vpop.f32.mrb[0].mxu0
    %v211 = vadd.f32 0.0, %v210
    %v212 = vpop.f32.mrb[0].mxu0
    %213 = vmatprep.mubr.f32.mxu0 0.0
    %214 = vmatmul.mubr.f32.gmra.mrb[0].mxu0 %v80
    %v215 = vpop.f32.mrb[0].mxu0
    %v216 = vadd.f32 0.0, %v215
    %v217 = vpop.f32.mrb[0].mxu0
    %218 = vmatprep.mubr.f32.mxu0 0.0
    %219 = vmatmul.mubr.f32.gmra.mrb[0].mxu0 %v83
    %v220 = vpop.f32.mrb[0].mxu0
    %v221 = vadd.f32 0.0, %v220
    %v222 = vpop.f32.mrb[0].mxu0
    %223 = vmatprep.mubr.f32.mxu0 0.0
    %224 = vmatmul.mubr.f32.gmra.mrb[0].mxu0 %v86
    %v225 = vpop.f32.mrb[0].mxu0
    %v226 = vadd.f32 0.0, %v225
    %v227 = vpop.f32.mrb[0].mxu0
    %228 = vmatprep.mubr.f32.mxu0 0.0
    %229 = vmatmul.mubr.f32.gmra.mrb[0].mxu0 %v89
    %v230 = vpop.f32.mrb[0].mxu0
    %v231 = vadd.f32 0.0, %v230
    %v232 = vpop.f32.mrb[0].mxu0
    %233 = vmatprep.mubr.f32.mxu0 0.0
    %234 = vmatmul.mubr.f32.gmra.mrb[0].mxu0 %v92
    %v235 = vpop.f32.mrb[0].mxu0
    %v236 = vadd.f32 0.0, %v235
    %v237 = vpop.f32.mrb[0].mxu0
    %238 = vdwg.mxu0
    %v239 = vld [vmem:[%s4] sm:$0xff]
    %v240 = vld [vmem:[%s4 + $0x8] sm:$0xff]
    %v241 = vld [vmem:[%s4 + $0x10] sm:$0xff]
    %v242 = vld [vmem:[%s4 + $0x18] sm:$0xff]
    %v243 = vld [vmem:[%s4 + $0x20] sm:$0xff]
    %v244 = vld [vmem:[%s4 + $0x28] sm:$0xff]
    %v245 = vld [vmem:[%s4 + $0x30] sm:$0xff]
    %v246 = vld [vmem:[%s4 + $0x38] sm:$0xff]
    %v247 = vld [vmem:[%s4 + $0x40] sm:$0xff]
    %v248 = vld [vmem:[%s4 + $0x48] sm:$0xff]
    %v249 = vld [vmem:[%s4 + $0x50] sm:$0xff]
    %v250 = vld [vmem:[%s4 + $0x58] sm:$0xff]
    %v251 = vld [vmem:[%s4 + $0x60] sm:$0xff]
    %v252 = vld [vmem:[%s4 + $0x68] sm:$0xff]
    %v253 = vld [vmem:[%s4 + $0x70] sm:$0xff]
    %v254 = vld [vmem:[%s4 + $0x78] sm:$0xff]
    %271 = vrot.lane.b32.xlu0 %v161, 96
    %v272 = vpop.permute.xlu0 %271
    %273 = vrot.lane.b32.xlu0 %v166, 96
    %v274 = vpop.permute.xlu0 %273
    %275 = vrot.lane.b32.xlu0 %v171, 96
    %v276 = vpop.permute.xlu0 %275
    %277 = vrot.lane.b32.xlu0 %v176, 96
    %v278 = vpop.permute.xlu0 %277
    %279 = vrot.lane.b32.xlu0 %v181, 96
    %v280 = vpop.permute.xlu0 %279
    %281 = vrot.lane.b32.xlu0 %v186, 96
    %v282 = vpop.permute.xlu0 %281
    %283 = vrot.lane.b32.xlu0 %v191, 96
    %v284 = vpop.permute.xlu0 %283
    %285 = vrot.lane.b32.xlu0 %v196, 96
    %v286 = vpop.permute.xlu0 %285
    %287 = vrot.lane.b32.xlu0 %v201, 96
    %v288 = vpop.permute.xlu0 %287
    %289 = vrot.lane.b32.xlu0 %v206, 96
    %v290 = vpop.permute.xlu0 %289
    %291 = vrot.lane.b32.xlu0 %v211, 96
    %v292 = vpop.permute.xlu0 %291
    %293 = vrot.lane.b32.xlu0 %v216, 96
    %v294 = vpop.permute.xlu0 %293
    %295 = vrot.lane.b32.xlu0 %v221, 96
    %v296 = vpop.permute.xlu0 %295
    %297 = vrot.lane.b32.xlu0 %v226, 96
    %v298 = vpop.permute.xlu0 %297
    %299 = vrot.lane.b32.xlu0 %v231, 96
    %v300 = vpop.permute.xlu0 %299
    %301 = vrot.lane.b32.xlu0 %v236, 96
    %v302 = vpop.permute.xlu0 %301
    %vm303 = vcmask 130048
    %v304 = vsel %vm303, %v161, 0
    %v306 = vsel %vm303, %v166, 0
    %v308 = vsel %vm303, %v171, 0
    %v310 = vsel %vm303, %v176, 0
    %v312 = vsel %vm303, %v181, 0
    %v314 = vsel %vm303, %v186, 0
    %v316 = vsel %vm303, %v191, 0
    %v318 = vsel %vm303, %v196, 0
    %v320 = vsel %vm303, %v201, 0
    %v322 = vsel %vm303, %v206, 0
    %v324 = vsel %vm303, %v211, 0
    %v326 = vsel %vm303, %v216, 0
    %v328 = vsel %vm303, %v221, 0
    %v330 = vsel %vm303, %v226, 0
    %v332 = vsel %vm303, %v231, 0
    %v334 = vsel %vm303, %v236, 0
    %v336 = vsel %vm303, %v272, 0
    %v338 = vsel %vm303, %v274, 0
    %v340 = vsel %vm303, %v276, 0
    %v342 = vsel %vm303, %v278, 0
    %v344 = vsel %vm303, %v280, 0
    %v346 = vsel %vm303, %v282, 0
    %v348 = vsel %vm303, %v284, 0
    %v350 = vsel %vm303, %v286, 0
    %v352 = vsel %vm303, %v288, 0
    %v354 = vsel %vm303, %v290, 0
    %v356 = vsel %vm303, %v292, 0
    %v358 = vsel %vm303, %v294, 0
    %v360 = vsel %vm303, %v296, 0
    %v362 = vsel %vm303, %v298, 0
    %v364 = vsel %vm303, %v300, 0
    %v366 = vsel %vm303, %v302, 0
    %368 = vmatprep.subr.mxu0 0.0
    %369 = vmatpush1.xpose.msra.mxu0 %v336
    %370 = vmatprep.subr.mxu0 0.0
    %371 = vmatpush1.xpose.msra.mxu0 %v338
    %372 = vmatprep.subr.mxu0 0.0
    %373 = vmatpush1.xpose.msra.mxu0 %v340
    %374 = vmatprep.subr.mxu0 0.0
    %375 = vmatpush1.xpose.msra.mxu0 %v342
    %376 = vmatprep.subr.mxu0 0.0
    %377 = vmatpush1.xpose.msra.mxu0 %v344
    %378 = vmatprep.subr.mxu0 0.0
    %379 = vmatpush1.xpose.msra.mxu0 %v346
    %380 = vmatprep.subr.mxu0 0.0
    %381 = vmatpush1.xpose.msra.mxu0 %v348
    %382 = vmatprep.subr.mxu0 0.0
    %383 = vmatpush1.xpose.msra.mxu0 %v350
    %384 = vmatprep.subr.mxu0 0.0
    %385 = vmatpush1.xpose.msra.mxu0 %v352
    %386 = vmatprep.subr.mxu0 0.0
    %387 = vmatpush1.xpose.msra.mxu0 %v354
    %388 = vmatprep.subr.mxu0 0.0
    %389 = vmatpush1.xpose.msra.mxu0 %v356
    %390 = vmatprep.subr.mxu0 0.0
    %391 = vmatpush1.xpose.msra.mxu0 %v358
    %392 = vmatprep.subr.mxu0 0.0
    %393 = vmatpush1.xpose.msra.mxu0 %v360
    %394 = vmatprep.subr.mxu0 0.0
    %395 = vmatpush1.xpose.msra.mxu0 %v362
    %396 = vmatprep.subr.mxu0 0.0
    %397 = vmatpush1.xpose.msra.mxu0 %v364
    %398 = vmatprep.subr.mxu0 0.0
    %399 = vmatpush1.xpose.msra.mxu0 %v366
    %400 = vmatprep.subr.mxu0 0.0
    %401 = vmatpush1.xpose.msra.mxu0 0.0
    %402 = vmatprep.subr.mxu0 0.0
    %403 = vmatpush1.xpose.msra.mxu0 0.0
    %404 = vmatprep.subr.mxu0 0.0
    %405 = vmatpush1.xpose.msra.mxu0 0.0
    %406 = vmatprep.subr.mxu0 0.0
    %407 = vmatpush1.xpose.msra.mxu0 0.0
    %408 = vmatprep.subr.mxu0 0.0
    %409 = vmatpush1.xpose.msra.mxu0 0.0
    %410 = vmatprep.subr.mxu0 0.0
    %411 = vmatpush1.xpose.msra.mxu0 0.0
    %412 = vmatprep.subr.mxu0 0.0
    %413 = vmatpush1.xpose.msra.mxu0 0.0
    %414 = vmatprep.subr.mxu0 0.0
    %415 = vmatpush1.xpose.msra.mxu0 0.0
    %416 = vmatprep.subr.mxu0 0.0
    %417 = vmatpush1.xpose.msra.mxu0 0.0
    %418 = vmatprep.subr.mxu0 0.0
    %419 = vmatpush1.xpose.msra.mxu0 0.0
    %420 = vmatprep.subr.mxu0 0.0
    %421 = vmatpush1.xpose.msra.mxu0 0.0
    %422 = vmatprep.subr.mxu0 0.0
    %423 = vmatpush1.xpose.msra.mxu0 0.0
    %424 = vmatprep.subr.mxu0 0.0
    %425 = vmatpush1.xpose.msra.mxu0 0.0
    %426 = vmatprep.subr.mxu0 0.0
    %427 = vmatpush1.xpose.msra.mxu0 0.0
    %428 = vmatprep.subr.mxu0 0.0
    %429 = vmatpush1.xpose.msra.mxu0 0.0
    %430 = vmatprep.subr.mxu0 0.0
    %431 = vmatpush1.xpose.msra.mxu0 0.0
    %432 = vmatprep.mubr.f32.mxu0 0.0
    %433 = vmatmul.mubr.f32.gmra.mrb[0].mxu0 %v304
    %v434 = vpop.f32.mrb[0].mxu0
    %v435 = vadd.f32 %v239, %v434
    %v436 = vpop.f32.mrb[0].mxu0
    %437 = vmatprep.mubr.f32.mxu0 0.0
    %438 = vmatmul.mubr.f32.gmra.mrb[0].mxu0 %v306
    %v439 = vpop.f32.mrb[0].mxu0
    %v440 = vadd.f32 %v240, %v439
    %v441 = vpop.f32.mrb[0].mxu0
    %442 = vmatprep.mubr.f32.mxu0 0.0
    %443 = vmatmul.mubr.f32.gmra.mrb[0].mxu0 %v308
    %v444 = vpop.f32.mrb[0].mxu0
    %v445 = vadd.f32 %v241, %v444
    %v446 = vpop.f32.mrb[0].mxu0
    %447 = vmatprep.mubr.f32.mxu0 0.0
    %448 = vmatmul.mubr.f32.gmra.mrb[0].mxu0 %v310
    %v449 = vpop.f32.mrb[0].mxu0
    %v450 = vadd.f32 %v242, %v449
    %v451 = vpop.f32.mrb[0].mxu0
    %452 = vmatprep.mubr.f32.mxu0 0.0
    %453 = vmatmul.mubr.f32.gmra.mrb[0].mxu0 %v312
    %v454 = vpop.f32.mrb[0].mxu0
    %v455 = vadd.f32 %v243, %v454
    %v456 = vpop.f32.mrb[0].mxu0
    %457 = vmatprep.mubr.f32.mxu0 0.0
    %458 = vmatmul.mubr.f32.gmra.mrb[0].mxu0 %v314
    %v459 = vpop.f32.mrb[0].mxu0
    %v460 = vadd.f32 %v244, %v459
    %v461 = vpop.f32.mrb[0].mxu0
    %462 = vmatprep.mubr.f32.mxu0 0.0
    %463 = vmatmul.mubr.f32.gmra.mrb[0].mxu0 %v316
    %v464 = vpop.f32.mrb[0].mxu0
    %v465 = vadd.f32 %v245, %v464
    %v466 = vpop.f32.mrb[0].mxu0
    %467 = vmatprep.mubr.f32.mxu0 0.0
    %468 = vmatmul.mubr.f32.gmra.mrb[0].mxu0 %v318
    %v469 = vpop.f32.mrb[0].mxu0
    %v470 = vadd.f32 %v246, %v469
    %v471 = vpop.f32.mrb[0].mxu0
    %472 = vmatprep.mubr.f32.mxu0 0.0
    %473 = vmatmul.mubr.f32.gmra.mrb[0].mxu0 %v320
    %v474 = vpop.f32.mrb[0].mxu0
    %v475 = vadd.f32 %v247, %v474
    %v476 = vpop.f32.mrb[0].mxu0
    %477 = vmatprep.mubr.f32.mxu0 0.0
    %478 = vmatmul.mubr.f32.gmra.mrb[0].mxu0 %v322
    %v479 = vpop.f32.mrb[0].mxu0
    %v480 = vadd.f32 %v248, %v479
    %v481 = vpop.f32.mrb[0].mxu0
    %482 = vmatprep.mubr.f32.mxu0 0.0
    %483 = vmatmul.mubr.f32.gmra.mrb[0].mxu0 %v324
    %v484 = vpop.f32.mrb[0].mxu0
    %v485 = vadd.f32 %v249, %v484
    %v486 = vpop.f32.mrb[0].mxu0
    %487 = vmatprep.mubr.f32.mxu0 0.0
    %488 = vmatmul.mubr.f32.gmra.mrb[0].mxu0 %v326
    %v489 = vpop.f32.mrb[0].mxu0
    %v490 = vadd.f32 %v250, %v489
    %v491 = vpop.f32.mrb[0].mxu0
    %492 = vmatprep.mubr.f32.mxu0 0.0
    %493 = vmatmul.mubr.f32.gmra.mrb[0].mxu0 %v328
    %v494 = vpop.f32.mrb[0].mxu0
    %v495 = vadd.f32 %v251, %v494
    %v496 = vpop.f32.mrb[0].mxu0
    %497 = vmatprep.mubr.f32.mxu0 0.0
    %498 = vmatmul.mubr.f32.gmra.mrb[0].mxu0 %v330
    %v499 = vpop.f32.mrb[0].mxu0
    %v500 = vadd.f32 %v252, %v499
    %v501 = vpop.f32.mrb[0].mxu0
    %502 = vmatprep.mubr.f32.mxu0 0.0
    %503 = vmatmul.mubr.f32.gmra.mrb[0].mxu0 %v332
    %v504 = vpop.f32.mrb[0].mxu0
    %v505 = vadd.f32 %v253, %v504
    %v506 = vpop.f32.mrb[0].mxu0
    %507 = vmatprep.mubr.f32.mxu0 0.0
    %508 = vmatmul.mubr.f32.gmra.mrb[0].mxu0 %v334
    %v509 = vpop.f32.mrb[0].mxu0
    %v510 = vadd.f32 %v254, %v509
    %v511 = vpop.f32.mrb[0].mxu0
    %512 = vdwg.mxu0
    %513 = vmax.xlane.f32.xlu0 %v435
    %v514 = vpop.xlane.xlu0 %513
    %515 = vmax.xlane.f32.xlu0 %v440
    %v516 = vpop.xlane.xlu0 %515
    %517 = vmax.xlane.f32.xlu0 %v445
    %v518 = vpop.xlane.xlu0 %517
    %519 = vmax.xlane.f32.xlu0 %v450
    %v520 = vpop.xlane.xlu0 %519
    %521 = vmax.xlane.f32.xlu0 %v455
    %v522 = vpop.xlane.xlu0 %521
    %523 = vmax.xlane.f32.xlu0 %v460
    %v524 = vpop.xlane.xlu0 %523
    %525 = vmax.xlane.f32.xlu0 %v465
    %v526 = vpop.xlane.xlu0 %525
    %527 = vmax.xlane.f32.xlu0 %v470
    %v528 = vpop.xlane.xlu0 %527
    %529 = vmax.xlane.f32.xlu0 %v475
    %v530 = vpop.xlane.xlu0 %529
    %531 = vmax.xlane.f32.xlu0 %v480
    %v532 = vpop.xlane.xlu0 %531
    %533 = vmax.xlane.f32.xlu0 %v485
    %v534 = vpop.xlane.xlu0 %533
    %535 = vmax.xlane.f32.xlu0 %v490
    %v536 = vpop.xlane.xlu0 %535
    %537 = vmax.xlane.f32.xlu0 %v495
    %v538 = vpop.xlane.xlu0 %537
    %539 = vmax.xlane.f32.xlu0 %v500
    %v540 = vpop.xlane.xlu0 %539
    %541 = vmax.xlane.f32.xlu0 %v505
    %v542 = vpop.xlane.xlu0 %541
    %543 = vmax.xlane.f32.xlu0 %v510
    %v544 = vpop.xlane.xlu0 %543
    %v545 = vsub.f32 %v435, %v514
    %v546 = vsub.f32 %v440, %v516
    %v547 = vsub.f32 %v445, %v518
    %v548 = vsub.f32 %v450, %v520
    %v549 = vsub.f32 %v455, %v522
    %v550 = vsub.f32 %v460, %v524
    %v551 = vsub.f32 %v465, %v526
    %v552 = vsub.f32 %v470, %v528
    %v553 = vsub.f32 %v475, %v530
    %v554 = vsub.f32 %v480, %v532
    %v555 = vsub.f32 %v485, %v534
    %v556 = vsub.f32 %v490, %v536
    %v557 = vsub.f32 %v495, %v538
    %v558 = vsub.f32 %v500, %v540
    %v559 = vsub.f32 %v505, %v542
    %v560 = vsub.f32 %v510, %v544
    %v561 = vmul.f32 %v545, 1.442695
    %v562 = vpow.pop %v561
    %v563 = vmul.f32 %v546, 1.442695
    %v564 = vpow.pop %v563
    %v565 = vmul.f32 %v547, 1.442695
    %v566 = vpow.pop %v565
    %v567 = vmul.f32 %v548, 1.442695
    %v568 = vpow.pop %v567
    %v569 = vmul.f32 %v549, 1.442695
    %v570 = vpow.pop %v569
    %v571 = vmul.f32 %v550, 1.442695
    %v572 = vpow.pop %v571
    %v573 = vmul.f32 %v551, 1.442695
    %v574 = vpow.pop %v573
    %v575 = vmul.f32 %v552, 1.442695
    %v576 = vpow.pop %v575
    %v577 = vmul.f32 %v553, 1.442695
    %v578 = vpow.pop %v577
    %v579 = vmul.f32 %v554, 1.442695
    %v580 = vpow.pop %v579
    %v581 = vmul.f32 %v555, 1.442695
    %v582 = vpow.pop %v581
    %v583 = vmul.f32 %v556, 1.442695
    %v584 = vpow.pop %v583
    %v585 = vmul.f32 %v557, 1.442695
    %v586 = vpow.pop %v585
    %v587 = vmul.f32 %v558, 1.442695
    %v588 = vpow.pop %v587
    %v589 = vmul.f32 %v559, 1.442695
    %v590 = vpow.pop %v589
    %v591 = vmul.f32 %v560, 1.442695
    %v592 = vpow.pop %v591
    %593 = vadd.xlane.f32.xlu0 %v562
    %v594 = vpop.xlane.xlu0 %593
    %595 = vadd.xlane.f32.xlu0 %v564
    %v596 = vpop.xlane.xlu0 %595
    %597 = vadd.xlane.f32.xlu0 %v566
    %v598 = vpop.xlane.xlu0 %597
    %599 = vadd.xlane.f32.xlu0 %v568
    %v600 = vpop.xlane.xlu0 %599
    %601 = vadd.xlane.f32.xlu0 %v570
    %v602 = vpop.xlane.xlu0 %601
    %603 = vadd.xlane.f32.xlu0 %v572
    %v604 = vpop.xlane.xlu0 %603
    %605 = vadd.xlane.f32.xlu0 %v574
    %v606 = vpop.xlane.xlu0 %605
    %607 = vadd.xlane.f32.xlu0 %v576
    %v608 = vpop.xlane.xlu0 %607
    %609 = vadd.xlane.f32.xlu0 %v578
    %v610 = vpop.xlane.xlu0 %609
    %611 = vadd.xlane.f32.xlu0 %v580
    %v612 = vpop.xlane.xlu0 %611
    %613 = vadd.xlane.f32.xlu0 %v582
    %v614 = vpop.xlane.xlu0 %613
    %615 = vadd.xlane.f32.xlu0 %v584
    %v616 = vpop.xlane.xlu0 %615
    %617 = vadd.xlane.f32.xlu0 %v586
    %v618 = vpop.xlane.xlu0 %617
    %619 = vadd.xlane.f32.xlu0 %v588
    %v620 = vpop.xlane.xlu0 %619
    %621 = vadd.xlane.f32.xlu0 %v590
    %v622 = vpop.xlane.xlu0 %621
    %623 = vadd.xlane.f32.xlu0 %v592
    %v624 = vpop.xlane.xlu0 %623
    %v625 = vrcp.pop %v594
    %v626 = vmul.f32 %v562, %v625
    %v627 = vrcp.pop %v596
    %v628 = vmul.f32 %v564, %v627
    %v629 = vrcp.pop %v598
    %v630 = vmul.f32 %v566, %v629
    %v631 = vrcp.pop %v600
    %v632 = vmul.f32 %v568, %v631
    %v633 = vrcp.pop %v602
    %v634 = vmul.f32 %v570, %v633
    %v635 = vrcp.pop %v604
    %v636 = vmul.f32 %v572, %v635
    %v637 = vrcp.pop %v606
    %v638 = vmul.f32 %v574, %v637
    %v639 = vrcp.pop %v608
    %v640 = vmul.f32 %v576, %v639
    %v641 = vrcp.pop %v610
    %v642 = vmul.f32 %v578, %v641
    %v643 = vrcp.pop %v612
    %v644 = vmul.f32 %v580, %v643
    %v645 = vrcp.pop %v614
    %v646 = vmul.f32 %v582, %v645
    %v647 = vrcp.pop %v616
    %v648 = vmul.f32 %v584, %v647
    %v649 = vrcp.pop %v618
    %v650 = vmul.f32 %v586, %v649
    %v651 = vrcp.pop %v620
    %v652 = vmul.f32 %v588, %v651
    %v653 = vrcp.pop %v622
    %v654 = vmul.f32 %v590, %v653
    %v655 = vrcp.pop %v624
    %v656 = vmul.f32 %v592, %v655
    %657 = vrot.lane.b32.xlu0 %v161, 64
    %v658 = vpop.permute.xlu0 %657
    %659 = vrot.lane.b32.xlu0 %v166, 64
    %v660 = vpop.permute.xlu0 %659
    %661 = vrot.lane.b32.xlu0 %v171, 64
    %v662 = vpop.permute.xlu0 %661
    %663 = vrot.lane.b32.xlu0 %v176, 64
    %v664 = vpop.permute.xlu0 %663
    %665 = vrot.lane.b32.xlu0 %v181, 64
    %v666 = vpop.permute.xlu0 %665
    %667 = vrot.lane.b32.xlu0 %v186, 64
    %v668 = vpop.permute.xlu0 %667
    %669 = vrot.lane.b32.xlu0 %v191, 64
    %v670 = vpop.permute.xlu0 %669
    %671 = vrot.lane.b32.xlu0 %v196, 64
    %v672 = vpop.permute.xlu0 %671
    %673 = vrot.lane.b32.xlu0 %v201, 64
    %v674 = vpop.permute.xlu0 %673
    %675 = vrot.lane.b32.xlu0 %v206, 64
    %v676 = vpop.permute.xlu0 %675
    %677 = vrot.lane.b32.xlu0 %v211, 64
    %v678 = vpop.permute.xlu0 %677
    %679 = vrot.lane.b32.xlu0 %v216, 64
    %v680 = vpop.permute.xlu0 %679
    %681 = vrot.lane.b32.xlu0 %v221, 64
    %v682 = vpop.permute.xlu0 %681
    %683 = vrot.lane.b32.xlu0 %v226, 64
    %v684 = vpop.permute.xlu0 %683
    %685 = vrot.lane.b32.xlu0 %v231, 64
    %v686 = vpop.permute.xlu0 %685
    %687 = vrot.lane.b32.xlu0 %v236, 64
    %v688 = vpop.permute.xlu0 %687
    %705 = vmatprep.subr.mxu0 0.0
    %706 = vmatpush1.msra.mxu0 %v658
    %707 = vmatprep.subr.mxu0 0.0
    %708 = vmatpush1.msra.mxu0 %v660
    %709 = vmatprep.subr.mxu0 0.0
    %710 = vmatpush1.msra.mxu0 %v662
    %711 = vmatprep.subr.mxu0 0.0
    %712 = vmatpush1.msra.mxu0 %v664
    %713 = vmatprep.subr.mxu0 0.0
    %714 = vmatpush1.msra.mxu0 %v666
    %715 = vmatprep.subr.mxu0 0.0
    %716 = vmatpush1.msra.mxu0 %v668
    %717 = vmatprep.subr.mxu0 0.0
    %718 = vmatpush1.msra.mxu0 %v670
    %719 = vmatprep.subr.mxu0 0.0
    %720 = vmatpush1.msra.mxu0 %v672
    %721 = vmatprep.subr.mxu0 0.0
    %722 = vmatpush1.msra.mxu0 %v674
    %723 = vmatprep.subr.mxu0 0.0
    %724 = vmatpush1.msra.mxu0 %v676
    %725 = vmatprep.subr.mxu0 0.0
    %726 = vmatpush1.msra.mxu0 %v678
    %727 = vmatprep.subr.mxu0 0.0
    %728 = vmatpush1.msra.mxu0 %v680
    %729 = vmatprep.subr.mxu0 0.0
    %730 = vmatpush1.msra.mxu0 %v682
    %731 = vmatprep.subr.mxu0 0.0
    %732 = vmatpush1.msra.mxu0 %v684
    %733 = vmatprep.subr.mxu0 0.0
    %734 = vmatpush1.msra.mxu0 %v686
    %735 = vmatprep.subr.mxu0 0.0
    %736 = vmatpush1.msra.mxu0 %v688
    %737 = vmatprep.subr.mxu0 0.0
    %738 = vmatpush1.msra.mxu0 0.0
    %739 = vmatprep.subr.mxu0 0.0
    %740 = vmatpush1.msra.mxu0 0.0
    %741 = vmatprep.subr.mxu0 0.0
    %742 = vmatpush1.msra.mxu0 0.0
    %743 = vmatprep.subr.mxu0 0.0
    %744 = vmatpush1.msra.mxu0 0.0
    %745 = vmatprep.subr.mxu0 0.0
    %746 = vmatpush1.msra.mxu0 0.0
    %747 = vmatprep.subr.mxu0 0.0
    %748 = vmatpush1.msra.mxu0 0.0
    %749 = vmatprep.subr.mxu0 0.0
    %750 = vmatpush1.msra.mxu0 0.0
    %751 = vmatprep.subr.mxu0 0.0
    %752 = vmatpush1.msra.mxu0 0.0
    %753 = vmatprep.subr.mxu0 0.0
    %754 = vmatpush1.msra.mxu0 0.0
    %755 = vmatprep.subr.mxu0 0.0
    %756 = vmatpush1.msra.mxu0 0.0
    %757 = vmatprep.subr.mxu0 0.0
    %758 = vmatpush1.msra.mxu0 0.0
    %759 = vmatprep.subr.mxu0 0.0
    %760 = vmatpush1.msra.mxu0 0.0
    %761 = vmatprep.subr.mxu0 0.0
    %762 = vmatpush1.msra.mxu0 0.0
    %763 = vmatprep.subr.mxu0 0.0
    %764 = vmatpush1.msra.mxu0 0.0
    %765 = vmatprep.subr.mxu0 0.0
    %766 = vmatpush1.msra.mxu0 0.0
    %767 = vmatprep.subr.mxu0 0.0
    %768 = vmatpush1.msra.mxu0 0.0
    %769 = vmatprep.mubr.f32.mxu0 0.0
    %770 = vmatmul.mubr.f32.gmra.mrb[0].mxu0 %v626
    %v771 = vpop.f32.mrb[0].mxu0
    %v772 = vadd.f32 0.0, %v771
    %v773 = vpop.f32.mrb[0].mxu0
    %774 = vmatprep.mubr.f32.mxu0 0.0
    %775 = vmatmul.mubr.f32.gmra.mrb[0].mxu0 %v628
    %v776 = vpop.f32.mrb[0].mxu0
    %v777 = vadd.f32 0.0, %v776
    %v778 = vpop.f32.mrb[0].mxu0
    %779 = vmatprep.mubr.f32.mxu0 0.0
    %780 = vmatmul.mubr.f32.gmra.mrb[0].mxu0 %v630
    %v781 = vpop.f32.mrb[0].mxu0
    %v782 = vadd.f32 0.0, %v781
    %v783 = vpop.f32.mrb[0].mxu0
    %784 = vmatprep.mubr.f32.mxu0 0.0
    %785 = vmatmul.mubr.f32.gmra.mrb[0].mxu0 %v632
    %v786 = vpop.f32.mrb[0].mxu0
    %v787 = vadd.f32 0.0, %v786
    %v788 = vpop.f32.mrb[0].mxu0
    %789 = vmatprep.mubr.f32.mxu0 0.0
    %790 = vmatmul.mubr.f32.gmra.mrb[0].mxu0 %v634
    %v791 = vpop.f32.mrb[0].mxu0
    %v792 = vadd.f32 0.0, %v791
    %v793 = vpop.f32.mrb[0].mxu0
    %794 = vmatprep.mubr.f32.mxu0 0.0
    %795 = vmatmul.mubr.f32.gmra.mrb[0].mxu0 %v636
    %v796 = vpop.f32.mrb[0].mxu0
    %v797 = vadd.f32 0.0, %v796
    %v798 = vpop.f32.mrb[0].mxu0
    %799 = vmatprep.mubr.f32.mxu0 0.0
    %800 = vmatmul.mubr.f32.gmra.mrb[0].mxu0 %v638
    %v801 = vpop.f32.mrb[0].mxu0
    %v802 = vadd.f32 0.0, %v801
    %v803 = vpop.f32.mrb[0].mxu0
    %804 = vmatprep.mubr.f32.mxu0 0.0
    %805 = vmatmul.mubr.f32.gmra.mrb[0].mxu0 %v640
    %v806 = vpop.f32.mrb[0].mxu0
    %v807 = vadd.f32 0.0, %v806
    %v808 = vpop.f32.mrb[0].mxu0
    %809 = vmatprep.mubr.f32.mxu0 0.0
    %810 = vmatmul.mubr.f32.gmra.mrb[0].mxu0 %v642
    %v811 = vpop.f32.mrb[0].mxu0
    %v812 = vadd.f32 0.0, %v811
    %v813 = vpop.f32.mrb[0].mxu0
    %814 = vmatprep.mubr.f32.mxu0 0.0
    %815 = vmatmul.mubr.f32.gmra.mrb[0].mxu0 %v644
    %v816 = vpop.f32.mrb[0].mxu0
    %v817 = vadd.f32 0.0, %v816
    %v818 = vpop.f32.mrb[0].mxu0
    %819 = vmatprep.mubr.f32.mxu0 0.0
    %820 = vmatmul.mubr.f32.gmra.mrb[0].mxu0 %v646
    %v821 = vpop.f32.mrb[0].mxu0
    %v822 = vadd.f32 0.0, %v821
    %v823 = vpop.f32.mrb[0].mxu0
    %824 = vmatprep.mubr.f32.mxu0 0.0
    %825 = vmatmul.mubr.f32.gmra.mrb[0].mxu0 %v648
    %v826 = vpop.f32.mrb[0].mxu0
    %v827 = vadd.f32 0.0, %v826
    %v828 = vpop.f32.mrb[0].mxu0
    %829 = vmatprep.mubr.f32.mxu0 0.0
    %830 = vmatmul.mubr.f32.gmra.mrb[0].mxu0 %v650
    %v831 = vpop.f32.mrb[0].mxu0
    %v832 = vadd.f32 0.0, %v831
    %v833 = vpop.f32.mrb[0].mxu0
    %834 = vmatprep.mubr.f32.mxu0 0.0
    %835 = vmatmul.mubr.f32.gmra.mrb[0].mxu0 %v652
    %v836 = vpop.f32.mrb[0].mxu0
    %v837 = vadd.f32 0.0, %v836
    %v838 = vpop.f32.mrb[0].mxu0
    %839 = vmatprep.mubr.f32.mxu0 0.0
    %840 = vmatmul.mubr.f32.gmra.mrb[0].mxu0 %v654
    %v841 = vpop.f32.mrb[0].mxu0
    %v842 = vadd.f32 0.0, %v841
    %v843 = vpop.f32.mrb[0].mxu0
    %844 = vmatprep.mubr.f32.mxu0 0.0
    %845 = vmatmul.mubr.f32.gmra.mrb[0].mxu0 %v656
    %v846 = vpop.f32.mrb[0].mxu0
    %v847 = vadd.f32 0.0, %v846
    %v848 = vpop.f32.mrb[0].mxu0
    %849 = vdwg.mxu0
    %850 = vrot.lane.b32.xlu0 %v161, 112
    %v851 = vpop.permute.xlu0 %850
    %852 = vrot.lane.b32.xlu0 %v166, 112
    %v853 = vpop.permute.xlu0 %852
    %854 = vrot.lane.b32.xlu0 %v171, 112
    %v855 = vpop.permute.xlu0 %854
    %856 = vrot.lane.b32.xlu0 %v176, 112
    %v857 = vpop.permute.xlu0 %856
    %858 = vrot.lane.b32.xlu0 %v181, 112
    %v859 = vpop.permute.xlu0 %858
    %860 = vrot.lane.b32.xlu0 %v186, 112
    %v861 = vpop.permute.xlu0 %860
    %862 = vrot.lane.b32.xlu0 %v191, 112
    %v863 = vpop.permute.xlu0 %862
    %864 = vrot.lane.b32.xlu0 %v196, 112
    %v865 = vpop.permute.xlu0 %864
    %866 = vrot.lane.b32.xlu0 %v201, 112
    %v867 = vpop.permute.xlu0 %866
    %868 = vrot.lane.b32.xlu0 %v206, 112
    %v869 = vpop.permute.xlu0 %868
    %870 = vrot.lane.b32.xlu0 %v211, 112
    %v871 = vpop.permute.xlu0 %870
    %872 = vrot.lane.b32.xlu0 %v216, 112
    %v873 = vpop.permute.xlu0 %872
    %874 = vrot.lane.b32.xlu0 %v221, 112
    %v875 = vpop.permute.xlu0 %874
    %876 = vrot.lane.b32.xlu0 %v226, 112
    %v877 = vpop.permute.xlu0 %876
    %878 = vrot.lane.b32.xlu0 %v231, 112
    %v879 = vpop.permute.xlu0 %878
    %880 = vrot.lane.b32.xlu0 %v236, 112
    %v881 = vpop.permute.xlu0 %880
    %882 = vrot.lane.b32.xlu0 %v161, 80
    %v883 = vpop.permute.xlu0 %882
    %884 = vrot.lane.b32.xlu0 %v166, 80
    %v885 = vpop.permute.xlu0 %884
    %886 = vrot.lane.b32.xlu0 %v171, 80
    %v887 = vpop.permute.xlu0 %886
    %888 = vrot.lane.b32.xlu0 %v176, 80
    %v889 = vpop.permute.xlu0 %888
    %890 = vrot.lane.b32.xlu0 %v181, 80
    %v891 = vpop.permute.xlu0 %890
    %892 = vrot.lane.b32.xlu0 %v186, 80
    %v893 = vpop.permute.xlu0 %892
    %894 = vrot.lane.b32.xlu0 %v191, 80
    %v895 = vpop.permute.xlu0 %894
    %896 = vrot.lane.b32.xlu0 %v196, 80
    %v897 = vpop.permute.xlu0 %896
    %898 = vrot.lane.b32.xlu0 %v201, 80
    %v899 = vpop.permute.xlu0 %898
    %900 = vrot.lane.b32.xlu0 %v206, 80
    %v901 = vpop.permute.xlu0 %900
    %902 = vrot.lane.b32.xlu0 %v211, 80
    %v903 = vpop.permute.xlu0 %902
    %904 = vrot.lane.b32.xlu0 %v216, 80
    %v905 = vpop.permute.xlu0 %904
    %906 = vrot.lane.b32.xlu0 %v221, 80
    %v907 = vpop.permute.xlu0 %906
    %908 = vrot.lane.b32.xlu0 %v226, 80
    %v909 = vpop.permute.xlu0 %908
    %910 = vrot.lane.b32.xlu0 %v231, 80
    %v911 = vpop.permute.xlu0 %910
    %912 = vrot.lane.b32.xlu0 %v236, 80
    %v913 = vpop.permute.xlu0 %912
    %v914 = vsel %vm303, %v851, 0
    %v916 = vsel %vm303, %v853, 0
    %v918 = vsel %vm303, %v855, 0
    %v920 = vsel %vm303, %v857, 0
    %v922 = vsel %vm303, %v859, 0
    %v924 = vsel %vm303, %v861, 0
    %v926 = vsel %vm303, %v863, 0
    %v928 = vsel %vm303, %v865, 0
    %v930 = vsel %vm303, %v867, 0
    %v932 = vsel %vm303, %v869, 0
    %v934 = vsel %vm303, %v871, 0
    %v936 = vsel %vm303, %v873, 0
    %v938 = vsel %vm303, %v875, 0
    %v940 = vsel %vm303, %v877, 0
    %v942 = vsel %vm303, %v879, 0
    %v944 = vsel %vm303, %v881, 0
    %v946 = vsel %vm303, %v883, 0
    %v948 = vsel %vm303, %v885, 0
    %v950 = vsel %vm303, %v887, 0
    %v952 = vsel %vm303, %v889, 0
    %v954 = vsel %vm303, %v891, 0
    %v956 = vsel %vm303, %v893, 0
    %v958 = vsel %vm303, %v895, 0
    %v960 = vsel %vm303, %v897, 0
    %v962 = vsel %vm303, %v899, 0
    %v964 = vsel %vm303, %v901, 0
    %v966 = vsel %vm303, %v903, 0
    %v968 = vsel %vm303, %v905, 0
    %v970 = vsel %vm303, %v907, 0
    %v972 = vsel %vm303, %v909, 0
    %v974 = vsel %vm303, %v911, 0
    %v976 = vsel %vm303, %v913, 0
    %978 = vmatprep.subr.mxu0 0.0
    %979 = vmatpush1.xpose.msra.mxu0 %v946
    %980 = vmatprep.subr.mxu0 0.0
    %981 = vmatpush1.xpose.msra.mxu0 %v948
    %982 = vmatprep.subr.mxu0 0.0
    %983 = vmatpush1.xpose.msra.mxu0 %v950
    %984 = vmatprep.subr.mxu0 0.0
    %985 = vmatpush1.xpose.msra.mxu0 %v952
    %986 = vmatprep.subr.mxu0 0.0
    %987 = vmatpush1.xpose.msra.mxu0 %v954
    %988 = vmatprep.subr.mxu0 0.0
    %989 = vmatpush1.xpose.msra.mxu0 %v956
    %990 = vmatprep.subr.mxu0 0.0
    %991 = vmatpush1.xpose.msra.mxu0 %v958
    %992 = vmatprep.subr.mxu0 0.0
    %993 = vmatpush1.xpose.msra.mxu0 %v960
    %994 = vmatprep.subr.mxu0 0.0
    %995 = vmatpush1.xpose.msra.mxu0 %v962
    %996 = vmatprep.subr.mxu0 0.0
    %997 = vmatpush1.xpose.msra.mxu0 %v964
    %998 = vmatprep.subr.mxu0 0.0
    %999 = vmatpush1.xpose.msra.mxu0 %v966
    %1000 = vmatprep.subr.mxu0 0.0
    %1001 = vmatpush1.xpose.msra.mxu0 %v968
    %1002 = vmatprep.subr.mxu0 0.0
    %1003 = vmatpush1.xpose.msra.mxu0 %v970
    %1004 = vmatprep.subr.mxu0 0.0
    %1005 = vmatpush1.xpose.msra.mxu0 %v972
    %1006 = vmatprep.subr.mxu0 0.0
    %1007 = vmatpush1.xpose.msra.mxu0 %v974
    %1008 = vmatprep.subr.mxu0 0.0
    %1009 = vmatpush1.xpose.msra.mxu0 %v976
    %1010 = vmatprep.subr.mxu0 0.0
    %1011 = vmatpush1.xpose.msra.mxu0 0.0
    %1012 = vmatprep.subr.mxu0 0.0
    %1013 = vmatpush1.xpose.msra.mxu0 0.0
    %1014 = vmatprep.subr.mxu0 0.0
    %1015 = vmatpush1.xpose.msra.mxu0 0.0
    %1016 = vmatprep.subr.mxu0 0.0
    %1017 = vmatpush1.xpose.msra.mxu0 0.0
    %1018 = vmatprep.subr.mxu0 0.0
    %1019 = vmatpush1.xpose.msra.mxu0 0.0
    %1020 = vmatprep.subr.mxu0 0.0
    %1021 = vmatpush1.xpose.msra.mxu0 0.0
    %1022 = vmatprep.subr.mxu0 0.0
    %1023 = vmatpush1.xpose.msra.mxu0 0.0
    %1024 = vmatprep.subr.mxu0 0.0
    %1025 = vmatpush1.xpose.msra.mxu0 0.0
    %1026 = vmatprep.subr.mxu0 0.0
    %1027 = vmatpush1.xpose.msra.mxu0 0.0
    %1028 = vmatprep.subr.mxu0 0.0
    %1029 = vmatpush1.xpose.msra.mxu0 0.0
    %1030 = vmatprep.subr.mxu0 0.0
    %1031 = vmatpush1.xpose.msra.mxu0 0.0
    %1032 = vmatprep.subr.mxu0 0.0
    %1033 = vmatpush1.xpose.msra.mxu0 0.0
    %1034 = vmatprep.subr.mxu0 0.0
    %1035 = vmatpush1.xpose.msra.mxu0 0.0
    %1036 = vmatprep.subr.mxu0 0.0
    %1037 = vmatpush1.xpose.msra.mxu0 0.0
    %1038 = vmatprep.subr.mxu0 0.0
    %1039 = vmatpush1.xpose.msra.mxu0 0.0
    %1040 = vmatprep.subr.mxu0 0.0
    %1041 = vmatpush1.xpose.msra.mxu0 0.0
    %1042 = vmatprep.mubr.f32.mxu0 0.0
    %1043 = vmatmul.mubr.f32.gmra.mrb[0].mxu0 %v914
    %v1044 = vpop.f32.mrb[0].mxu0
    %v1045 = vadd.f32 %v239, %v1044
    %v1046 = vpop.f32.mrb[0].mxu0
    %1047 = vmatprep.mubr.f32.mxu0 0.0
    %1048 = vmatmul.mubr.f32.gmra.mrb[0].mxu0 %v916
    %v1049 = vpop.f32.mrb[0].mxu0
    %v1050 = vadd.f32 %v240, %v1049
    %v1051 = vpop.f32.mrb[0].mxu0
    %1052 = vmatprep.mubr.f32.mxu0 0.0
    %1053 = vmatmul.mubr.f32.gmra.mrb[0].mxu0 %v918
    %v1054 = vpop.f32.mrb[0].mxu0
    %v1055 = vadd.f32 %v241, %v1054
    %v1056 = vpop.f32.mrb[0].mxu0
    %1057 = vmatprep.mubr.f32.mxu0 0.0
    %1058 = vmatmul.mubr.f32.gmra.mrb[0].mxu0 %v920
    %v1059 = vpop.f32.mrb[0].mxu0
    %v1060 = vadd.f32 %v242, %v1059
    %v1061 = vpop.f32.mrb[0].mxu0
    %1062 = vmatprep.mubr.f32.mxu0 0.0
    %1063 = vmatmul.mubr.f32.gmra.mrb[0].mxu0 %v922
    %v1064 = vpop.f32.mrb[0].mxu0
    %v1065 = vadd.f32 %v243, %v1064
    %v1066 = vpop.f32.mrb[0].mxu0
    %1067 = vmatprep.mubr.f32.mxu0 0.0
    %1068 = vmatmul.mubr.f32.gmra.mrb[0].mxu0 %v924
    %v1069 = vpop.f32.mrb[0].mxu0
    %v1070 = vadd.f32 %v244, %v1069
    %v1071 = vpop.f32.mrb[0].mxu0
    %1072 = vmatprep.mubr.f32.mxu0 0.0
    %1073 = vmatmul.mubr.f32.gmra.mrb[0].mxu0 %v926
    %v1074 = vpop.f32.mrb[0].mxu0
    %v1075 = vadd.f32 %v245, %v1074
    %v1076 = vpop.f32.mrb[0].mxu0
    %1077 = vmatprep.mubr.f32.mxu0 0.0
    %1078 = vmatmul.mubr.f32.gmra.mrb[0].mxu0 %v928
    %v1079 = vpop.f32.mrb[0].mxu0
    %v1080 = vadd.f32 %v246, %v1079
    %v1081 = vpop.f32.mrb[0].mxu0
    %1082 = vmatprep.mubr.f32.mxu0 0.0
    %1083 = vmatmul.mubr.f32.gmra.mrb[0].mxu0 %v930
    %v1084 = vpop.f32.mrb[0].mxu0
    %v1085 = vadd.f32 %v247, %v1084
    %v1086 = vpop.f32.mrb[0].mxu0
    %1087 = vmatprep.mubr.f32.mxu0 0.0
    %1088 = vmatmul.mubr.f32.gmra.mrb[0].mxu0 %v932
    %v1089 = vpop.f32.mrb[0].mxu0
    %v1090 = vadd.f32 %v248, %v1089
    %v1091 = vpop.f32.mrb[0].mxu0
    %1092 = vmatprep.mubr.f32.mxu0 0.0
    %1093 = vmatmul.mubr.f32.gmra.mrb[0].mxu0 %v934
    %v1094 = vpop.f32.mrb[0].mxu0
    %v1095 = vadd.f32 %v249, %v1094
    %v1096 = vpop.f32.mrb[0].mxu0
    %1097 = vmatprep.mubr.f32.mxu0 0.0
    %1098 = vmatmul.mubr.f32.gmra.mrb[0].mxu0 %v936
    %v1099 = vpop.f32.mrb[0].mxu0
    %v1100 = vadd.f32 %v250, %v1099
    %v1101 = vpop.f32.mrb[0].mxu0
    %1102 = vmatprep.mubr.f32.mxu0 0.0
    %1103 = vmatmul.mubr.f32.gmra.mrb[0].mxu0 %v938
    %v1104 = vpop.f32.mrb[0].mxu0
    %v1105 = vadd.f32 %v251, %v1104
    %v1106 = vpop.f32.mrb[0].mxu0
    %1107 = vmatprep.mubr.f32.mxu0 0.0
    %1108 = vmatmul.mubr.f32.gmra.mrb[0].mxu0 %v940
    %v1109 = vpop.f32.mrb[0].mxu0
    %v1110 = vadd.f32 %v252, %v1109
    %v1111 = vpop.f32.mrb[0].mxu0
    %1112 = vmatprep.mubr.f32.mxu0 0.0
    %1113 = vmatmul.mubr.f32.gmra.mrb[0].mxu0 %v942
    %v1114 = vpop.f32.mrb[0].mxu0
    %v1115 = vadd.f32 %v253, %v1114
    %v1116 = vpop.f32.mrb[0].mxu0
    %1117 = vmatprep.mubr.f32.mxu0 0.0
    %1118 = vmatmul.mubr.f32.gmra.mrb[0].mxu0 %v944
    %v1119 = vpop.f32.mrb[0].mxu0
    %v1120 = vadd.f32 %v254, %v1119
    %v1121 = vpop.f32.mrb[0].mxu0
    %1122 = vdwg.mxu0
    %1123 = vmax.xlane.f32.xlu0 %v1045
    %v1124 = vpop.xlane.xlu0 %1123
    %1125 = vmax.xlane.f32.xlu0 %v1050
    %v1126 = vpop.xlane.xlu0 %1125
    %1127 = vmax.xlane.f32.xlu0 %v1055
    %v1128 = vpop.xlane.xlu0 %1127
    %1129 = vmax.xlane.f32.xlu0 %v1060
    %v1130 = vpop.xlane.xlu0 %1129
    %1131 = vmax.xlane.f32.xlu0 %v1065
    %v1132 = vpop.xlane.xlu0 %1131
    %1133 = vmax.xlane.f32.xlu0 %v1070
    %v1134 = vpop.xlane.xlu0 %1133
    %1135 = vmax.xlane.f32.xlu0 %v1075
    %v1136 = vpop.xlane.xlu0 %1135
    %1137 = vmax.xlane.f32.xlu0 %v1080
    %v1138 = vpop.xlane.xlu0 %1137
    %1139 = vmax.xlane.f32.xlu0 %v1085
    %v1140 = vpop.xlane.xlu0 %1139
    %1141 = vmax.xlane.f32.xlu0 %v1090
    %v1142 = vpop.xlane.xlu0 %1141
    %1143 = vmax.xlane.f32.xlu0 %v1095
    %v1144 = vpop.xlane.xlu0 %1143
    %1145 = vmax.xlane.f32.xlu0 %v1100
    %v1146 = vpop.xlane.xlu0 %1145
    %1147 = vmax.xlane.f32.xlu0 %v1105
    %v1148 = vpop.xlane.xlu0 %1147
    %1149 = vmax.xlane.f32.xlu0 %v1110
    %v1150 = vpop.xlane.xlu0 %1149
    %1151 = vmax.xlane.f32.xlu0 %v1115
    %v1152 = vpop.xlane.xlu0 %1151
    %1153 = vmax.xlane.f32.xlu0 %v1120
    %v1154 = vpop.xlane.xlu0 %1153
    %v1155 = vsub.f32 %v1045, %v1124
    %v1156 = vsub.f32 %v1050, %v1126
    %v1157 = vsub.f32 %v1055, %v1128
    %v1158 = vsub.f32 %v1060, %v1130
    %v1159 = vsub.f32 %v1065, %v1132
    %v1160 = vsub.f32 %v1070, %v1134
    %v1161 = vsub.f32 %v1075, %v1136
    %v1162 = vsub.f32 %v1080, %v1138
    %v1163 = vsub.f32 %v1085, %v1140
    %v1164 = vsub.f32 %v1090, %v1142
    %v1165 = vsub.f32 %v1095, %v1144
    %v1166 = vsub.f32 %v1100, %v1146
    %v1167 = vsub.f32 %v1105, %v1148
    %v1168 = vsub.f32 %v1110, %v1150
    %v1169 = vsub.f32 %v1115, %v1152
    %v1170 = vsub.f32 %v1120, %v1154
    %v1171 = vmul.f32 %v1155, 1.442695
    %v1172 = vpow.pop %v1171
    %v1173 = vmul.f32 %v1156, 1.442695
    %v1174 = vpow.pop %v1173
    %v1175 = vmul.f32 %v1157, 1.442695
    %v1176 = vpow.pop %v1175
    %v1177 = vmul.f32 %v1158, 1.442695
    %v1178 = vpow.pop %v1177
    %v1179 = vmul.f32 %v1159, 1.442695
    %v1180 = vpow.pop %v1179
    %v1181 = vmul.f32 %v1160, 1.442695
    %v1182 = vpow.pop %v1181
    %v1183 = vmul.f32 %v1161, 1.442695
    %v1184 = vpow.pop %v1183
    %v1185 = vmul.f32 %v1162, 1.442695
    %v1186 = vpow.pop %v1185
    %v1187 = vmul.f32 %v1163, 1.442695
    %v1188 = vpow.pop %v1187
    %v1189 = vmul.f32 %v1164, 1.442695
    %v1190 = vpow.pop %v1189
    %v1191 = vmul.f32 %v1165, 1.442695
    %v1192 = vpow.pop %v1191
    %v1193 = vmul.f32 %v1166, 1.442695
    %v1194 = vpow.pop %v1193
    %v1195 = vmul.f32 %v1167, 1.442695
    %v1196 = vpow.pop %v1195
    %v1197 = vmul.f32 %v1168, 1.442695
    %v1198 = vpow.pop %v1197
    %v1199 = vmul.f32 %v1169, 1.442695
    %v1200 = vpow.pop %v1199
    %v1201 = vmul.f32 %v1170, 1.442695
    %v1202 = vpow.pop %v1201
    %1203 = vadd.xlane.f32.xlu0 %v1172
    %v1204 = vpop.xlane.xlu0 %1203
    %1205 = vadd.xlane.f32.xlu0 %v1174
    %v1206 = vpop.xlane.xlu0 %1205
    %1207 = vadd.xlane.f32.xlu0 %v1176
    %v1208 = vpop.xlane.xlu0 %1207
    %1209 = vadd.xlane.f32.xlu0 %v1178
    %v1210 = vpop.xlane.xlu0 %1209
    %1211 = vadd.xlane.f32.xlu0 %v1180
    %v1212 = vpop.xlane.xlu0 %1211
    %1213 = vadd.xlane.f32.xlu0 %v1182
    %v1214 = vpop.xlane.xlu0 %1213
    %1215 = vadd.xlane.f32.xlu0 %v1184
    %v1216 = vpop.xlane.xlu0 %1215
    %1217 = vadd.xlane.f32.xlu0 %v1186
    %v1218 = vpop.xlane.xlu0 %1217
    %1219 = vadd.xlane.f32.xlu0 %v1188
    %v1220 = vpop.xlane.xlu0 %1219
    %1221 = vadd.xlane.f32.xlu0 %v1190
    %v1222 = vpop.xlane.xlu0 %1221
    %1223 = vadd.xlane.f32.xlu0 %v1192
    %v1224 = vpop.xlane.xlu0 %1223
    %1225 = vadd.xlane.f32.xlu0 %v1194
    %v1226 = vpop.xlane.xlu0 %1225
    %1227 = vadd.xlane.f32.xlu0 %v1196
    %v1228 = vpop.xlane.xlu0 %1227
    %1229 = vadd.xlane.f32.xlu0 %v1198
    %v1230 = vpop.xlane.xlu0 %1229
    %1231 = vadd.xlane.f32.xlu0 %v1200
    %v1232 = vpop.xlane.xlu0 %1231
    %1233 = vadd.xlane.f32.xlu0 %v1202
    %v1234 = vpop.xlane.xlu0 %1233
    %v1235 = vrcp.pop %v1204
    %v1236 = vmul.f32 %v1172, %v1235
    %v1237 = vrcp.pop %v1206
    %v1238 = vmul.f32 %v1174, %v1237
    %v1239 = vrcp.pop %v1208
    %v1240 = vmul.f32 %v1176, %v1239
    %v1241 = vrcp.pop %v1210
    %v1242 = vmul.f32 %v1178, %v1241
    %v1243 = vrcp.pop %v1212
    %v1244 = vmul.f32 %v1180, %v1243
    %v1245 = vrcp.pop %v1214
    %v1246 = vmul.f32 %v1182, %v1245
    %v1247 = vrcp.pop %v1216
    %v1248 = vmul.f32 %v1184, %v1247
    %v1249 = vrcp.pop %v1218
    %v1250 = vmul.f32 %v1186, %v1249
    %v1251 = vrcp.pop %v1220
    %v1252 = vmul.f32 %v1188, %v1251
    %v1253 = vrcp.pop %v1222
    %v1254 = vmul.f32 %v1190, %v1253
    %v1255 = vrcp.pop %v1224
    %v1256 = vmul.f32 %v1192, %v1255
    %v1257 = vrcp.pop %v1226
    %v1258 = vmul.f32 %v1194, %v1257
    %v1259 = vrcp.pop %v1228
    %v1260 = vmul.f32 %v1196, %v1259
    %v1261 = vrcp.pop %v1230
    %v1262 = vmul.f32 %v1198, %v1261
    %v1263 = vrcp.pop %v1232
    %v1264 = vmul.f32 %v1200, %v1263
    %v1265 = vrcp.pop %v1234
    %v1266 = vmul.f32 %v1202, %v1265
    %1267 = vrot.lane.b32.xlu0 %v161, 48
    %v1268 = vpop.permute.xlu0 %1267
    %1269 = vrot.lane.b32.xlu0 %v166, 48
    %v1270 = vpop.permute.xlu0 %1269
    %1271 = vrot.lane.b32.xlu0 %v171, 48
    %v1272 = vpop.permute.xlu0 %1271
    %1273 = vrot.lane.b32.xlu0 %v176, 48
    %v1274 = vpop.permute.xlu0 %1273
    %1275 = vrot.lane.b32.xlu0 %v181, 48
    %v1276 = vpop.permute.xlu0 %1275
    %1277 = vrot.lane.b32.xlu0 %v186, 48
    %v1278 = vpop.permute.xlu0 %1277
    %1279 = vrot.lane.b32.xlu0 %v191, 48
    %v1280 = vpop.permute.xlu0 %1279
    %1281 = vrot.lane.b32.xlu0 %v196, 48
    %v1282 = vpop.permute.xlu0 %1281
    %1283 = vrot.lane.b32.xlu0 %v201, 48
    %v1284 = vpop.permute.xlu0 %1283
    %1285 = vrot.lane.b32.xlu0 %v206, 48
    %v1286 = vpop.permute.xlu0 %1285
    %1287 = vrot.lane.b32.xlu0 %v211, 48
    %v1288 = vpop.permute.xlu0 %1287
    %1289 = vrot.lane.b32.xlu0 %v216, 48
    %v1290 = vpop.permute.xlu0 %1289
    %1291 = vrot.lane.b32.xlu0 %v221, 48
    %v1292 = vpop.permute.xlu0 %1291
    %1293 = vrot.lane.b32.xlu0 %v226, 48
    %v1294 = vpop.permute.xlu0 %1293
    %1295 = vrot.lane.b32.xlu0 %v231, 48
    %v1296 = vpop.permute.xlu0 %1295
    %1297 = vrot.lane.b32.xlu0 %v236, 48
    %v1298 = vpop.permute.xlu0 %1297
    %1315 = vmatprep.subr.mxu0 0.0
    %1316 = vmatpush1.msra.mxu0 %v1268
    %1317 = vmatprep.subr.mxu0 0.0
    %1318 = vmatpush1.msra.mxu0 %v1270
    %1319 = vmatprep.subr.mxu0 0.0
    %1320 = vmatpush1.msra.mxu0 %v1272
    %1321 = vmatprep.subr.mxu0 0.0
    %1322 = vmatpush1.msra.mxu0 %v1274
    %1323 = vmatprep.subr.mxu0 0.0
    %1324 = vmatpush1.msra.mxu0 %v1276
    %1325 = vmatprep.subr.mxu0 0.0
    %1326 = vmatpush1.msra.mxu0 %v1278
    %1327 = vmatprep.subr.mxu0 0.0
    %1328 = vmatpush1.msra.mxu0 %v1280
    %1329 = vmatprep.subr.mxu0 0.0
    %1330 = vmatpush1.msra.mxu0 %v1282
    %1331 = vmatprep.subr.mxu0 0.0
    %1332 = vmatpush1.msra.mxu0 %v1284
    %1333 = vmatprep.subr.mxu0 0.0
    %1334 = vmatpush1.msra.mxu0 %v1286
    %1335 = vmatprep.subr.mxu0 0.0
    %1336 = vmatpush1.msra.mxu0 %v1288
    %1337 = vmatprep.subr.mxu0 0.0
    %1338 = vmatpush1.msra.mxu0 %v1290
    %1339 = vmatprep.subr.mxu0 0.0
    %1340 = vmatpush1.msra.mxu0 %v1292
    %1341 = vmatprep.subr.mxu0 0.0
    %1342 = vmatpush1.msra.mxu0 %v1294
    %1343 = vmatprep.subr.mxu0 0.0
    %1344 = vmatpush1.msra.mxu0 %v1296
    %1345 = vmatprep.subr.mxu0 0.0
    %1346 = vmatpush1.msra.mxu0 %v1298
    %1347 = vmatprep.subr.mxu0 0.0
    %1348 = vmatpush1.msra.mxu0 0.0
    %1349 = vmatprep.subr.mxu0 0.0
    %1350 = vmatpush1.msra.mxu0 0.0
    %1351 = vmatprep.subr.mxu0 0.0
    %1352 = vmatpush1.msra.mxu0 0.0
    %1353 = vmatprep.subr.mxu0 0.0
    %1354 = vmatpush1.msra.mxu0 0.0
    %1355 = vmatprep.subr.mxu0 0.0
    %1356 = vmatpush1.msra.mxu0 0.0
    %1357 = vmatprep.subr.mxu0 0.0
    %1358 = vmatpush1.msra.mxu0 0.0
    %1359 = vmatprep.subr.mxu0 0.0
    %1360 = vmatpush1.msra.mxu0 0.0
    %1361 = vmatprep.subr.mxu0 0.0
    %1362 = vmatpush1.msra.mxu0 0.0
    %1363 = vmatprep.subr.mxu0 0.0
    %1364 = vmatpush1.msra.mxu0 0.0
    %1365 = vmatprep.subr.mxu0 0.0
    %1366 = vmatpush1.msra.mxu0 0.0
    %1367 = vmatprep.subr.mxu0 0.0
    %1368 = vmatpush1.msra.mxu0 0.0
    %1369 = vmatprep.subr.mxu0 0.0
    %1370 = vmatpush1.msra.mxu0 0.0
    %1371 = vmatprep.subr.mxu0 0.0
    %1372 = vmatpush1.msra.mxu0 0.0
    %1373 = vmatprep.subr.mxu0 0.0
    %1374 = vmatpush1.msra.mxu0 0.0
    %1375 = vmatprep.subr.mxu0 0.0
    %1376 = vmatpush1.msra.mxu0 0.0
    %1377 = vmatprep.subr.mxu0 0.0
    %1378 = vmatpush1.msra.mxu0 0.0
    %1379 = vmatprep.mubr.f32.mxu0 0.0
    %1380 = vmatmul.mubr.f32.gmra.mrb[0].mxu0 %v1236
    %v1381 = vpop.f32.mrb[0].mxu0
    %v1382 = vadd.f32 0.0, %v1381
    %v1383 = vpop.f32.mrb[0].mxu0
    %1384 = vmatprep.mubr.f32.mxu0 0.0
    %1385 = vmatmul.mubr.f32.gmra.mrb[0].mxu0 %v1238
    %v1386 = vpop.f32.mrb[0].mxu0
    %v1387 = vadd.f32 0.0, %v1386
    %v1388 = vpop.f32.mrb[0].mxu0
    %1389 = vmatprep.mubr.f32.mxu0 0.0
    %1390 = vmatmul.mubr.f32.gmra.mrb[0].mxu0 %v1240
    %v1391 = vpop.f32.mrb[0].mxu0
    %v1392 = vadd.f32 0.0, %v1391
    %v1393 = vpop.f32.mrb[0].mxu0
    %1394 = vmatprep.mubr.f32.mxu0 0.0
    %1395 = vmatmul.mubr.f32.gmra.mrb[0].mxu0 %v1242
    %v1396 = vpop.f32.mrb[0].mxu0
    %v1397 = vadd.f32 0.0, %v1396
    %v1398 = vpop.f32.mrb[0].mxu0
    %1399 = vmatprep.mubr.f32.mxu0 0.0
    %1400 = vmatmul.mubr.f32.gmra.mrb[0].mxu0 %v1244
    %v1401 = vpop.f32.mrb[0].mxu0
    %v1402 = vadd.f32 0.0, %v1401
    %v1403 = vpop.f32.mrb[0].mxu0
    %1404 = vmatprep.mubr.f32.mxu0 0.0
    %1405 = vmatmul.mubr.f32.gmra.mrb[0].mxu0 %v1246
    %v1406 = vpop.f32.mrb[0].mxu0
    %v1407 = vadd.f32 0.0, %v1406
    %v1408 = vpop.f32.mrb[0].mxu0
    %1409 = vmatprep.mubr.f32.mxu0 0.0
    %1410 = vmatmul.mubr.f32.gmra.mrb[0].mxu0 %v1248
    %v1411 = vpop.f32.mrb[0].mxu0
    %v1412 = vadd.f32 0.0, %v1411
    %v1413 = vpop.f32.mrb[0].mxu0
    %1414 = vmatprep.mubr.f32.mxu0 0.0
    %1415 = vmatmul.mubr.f32.gmra.mrb[0].mxu0 %v1250
    %v1416 = vpop.f32.mrb[0].mxu0
    %v1417 = vadd.f32 0.0, %v1416
    %v1418 = vpop.f32.mrb[0].mxu0
    %1419 = vmatprep.mubr.f32.mxu0 0.0
    %1420 = vmatmul.mubr.f32.gmra.mrb[0].mxu0 %v1252
    %v1421 = vpop.f32.mrb[0].mxu0
    %v1422 = vadd.f32 0.0, %v1421
    %v1423 = vpop.f32.mrb[0].mxu0
    %1424 = vmatprep.mubr.f32.mxu0 0.0
    %1425 = vmatmul.mubr.f32.gmra.mrb[0].mxu0 %v1254
    %v1426 = vpop.f32.mrb[0].mxu0
    %v1427 = vadd.f32 0.0, %v1426
    %v1428 = vpop.f32.mrb[0].mxu0
    %1429 = vmatprep.mubr.f32.mxu0 0.0
    %1430 = vmatmul.mubr.f32.gmra.mrb[0].mxu0 %v1256
    %v1431 = vpop.f32.mrb[0].mxu0
    %v1432 = vadd.f32 0.0, %v1431
    %v1433 = vpop.f32.mrb[0].mxu0
    %1434 = vmatprep.mubr.f32.mxu0 0.0
    %1435 = vmatmul.mubr.f32.gmra.mrb[0].mxu0 %v1258
    %v1436 = vpop.f32.mrb[0].mxu0
    %v1437 = vadd.f32 0.0, %v1436
    %v1438 = vpop.f32.mrb[0].mxu0
    %1439 = vmatprep.mubr.f32.mxu0 0.0
    %1440 = vmatmul.mubr.f32.gmra.mrb[0].mxu0 %v1260
    %v1441 = vpop.f32.mrb[0].mxu0
    %v1442 = vadd.f32 0.0, %v1441
    %v1443 = vpop.f32.mrb[0].mxu0
    %1444 = vmatprep.mubr.f32.mxu0 0.0
    %1445 = vmatmul.mubr.f32.gmra.mrb[0].mxu0 %v1262
    %v1446 = vpop.f32.mrb[0].mxu0
    %v1447 = vadd.f32 0.0, %v1446
    %v1448 = vpop.f32.mrb[0].mxu0
    %1449 = vmatprep.mubr.f32.mxu0 0.0
    %1450 = vmatmul.mubr.f32.gmra.mrb[0].mxu0 %v1264
    %v1451 = vpop.f32.mrb[0].mxu0
    %v1452 = vadd.f32 0.0, %v1451
    %v1453 = vpop.f32.mrb[0].mxu0
    %1454 = vmatprep.mubr.f32.mxu0 0.0
    %1455 = vmatmul.mubr.f32.gmra.mrb[0].mxu0 %v1266
    %v1456 = vpop.f32.mrb[0].mxu0
    %v1457 = vadd.f32 0.0, %v1456
    %v1458 = vpop.f32.mrb[0].mxu0
    %1459 = vdwg.mxu0
    %1476 = vrot.lane.b32.xlu0 %v1382, 16
    %v1477 = vpop.permute.xlu0 %1476
    %1478 = vrot.lane.b32.xlu0 %v1387, 16
    %v1479 = vpop.permute.xlu0 %1478
    %1480 = vrot.lane.b32.xlu0 %v1392, 16
    %v1481 = vpop.permute.xlu0 %1480
    %1482 = vrot.lane.b32.xlu0 %v1397, 16
    %v1483 = vpop.permute.xlu0 %1482
    %1484 = vrot.lane.b32.xlu0 %v1402, 16
    %v1485 = vpop.permute.xlu0 %1484
    %1486 = vrot.lane.b32.xlu0 %v1407, 16
    %v1487 = vpop.permute.xlu0 %1486
    %1488 = vrot.lane.b32.xlu0 %v1412, 16
    %v1489 = vpop.permute.xlu0 %1488
    %1490 = vrot.lane.b32.xlu0 %v1417, 16
    %v1491 = vpop.permute.xlu0 %1490
    %1492 = vrot.lane.b32.xlu0 %v1422, 16
    %v1493 = vpop.permute.xlu0 %1492
    %1494 = vrot.lane.b32.xlu0 %v1427, 16
    %v1495 = vpop.permute.xlu0 %1494
    %1496 = vrot.lane.b32.xlu0 %v1432, 16
    %v1497 = vpop.permute.xlu0 %1496
    %1498 = vrot.lane.b32.xlu0 %v1437, 16
    %v1499 = vpop.permute.xlu0 %1498
    %1500 = vrot.lane.b32.xlu0 %v1442, 16
    %v1501 = vpop.permute.xlu0 %1500
    %1502 = vrot.lane.b32.xlu0 %v1447, 16
    %v1503 = vpop.permute.xlu0 %1502
    %1504 = vrot.lane.b32.xlu0 %v1452, 16
    %v1505 = vpop.permute.xlu0 %1504
    %1506 = vrot.lane.b32.xlu0 %v1457, 16
    %v1507 = vpop.permute.xlu0 %1506
    %v1524 = vsel %vm303, %v772, %v1477
    %v1525 = vsel %vm303, %v777, %v1479
    %v1526 = vsel %vm303, %v782, %v1481
    %v1527 = vsel %vm303, %v787, %v1483
    %v1528 = vsel %vm303, %v792, %v1485
    %v1529 = vsel %vm303, %v797, %v1487
    %v1530 = vsel %vm303, %v802, %v1489
    %v1531 = vsel %vm303, %v807, %v1491
    %v1532 = vsel %vm303, %v812, %v1493
    %v1533 = vsel %vm303, %v817, %v1495
    %v1534 = vsel %vm303, %v822, %v1497
    %v1535 = vsel %vm303, %v827, %v1499
    %v1536 = vsel %vm303, %v832, %v1501
    %v1537 = vsel %vm303, %v837, %v1503
    %v1538 = vsel %vm303, %v842, %v1505
    %v1539 = vsel %vm303, %v847, %v1507
    %v1540 = vld [vmem:[%s2] sm:$0xff]
    %v1541 = vld [vmem:[%s2 + $0x8] sm:$0xff]
    %v1542 = vld [vmem:[%s2 + $0x10] sm:$0xff]
    %v1543 = vld [vmem:[%s2 + $0x18] sm:$0xff]
    %v1544 = vld [vmem:[%s3] sm:$0x1]
    %v1546 = vlaneseq
    %v1547 = vshrl.u32 %v1546, 7
    %v1548 = vsub.s32 0, %v1547
    %v1549 = vrot.slane %v1544, %v1548
    %vm1551 = vcmask 261120
    %v1553 = vsel %vm1551, %v1524, 0
    %v1556 = vsel %vm1551, %v1525, 0
    %v1559 = vsel %vm1551, %v1526, 0
    %v1562 = vsel %vm1551, %v1527, 0
    %v1565 = vsel %vm1551, %v1528, 0
    %v1568 = vsel %vm1551, %v1529, 0
    %v1571 = vsel %vm1551, %v1530, 0
    %v1574 = vsel %vm1551, %v1531, 0
    %v1577 = vsel %vm1551, %v1532, 0
    %v1580 = vsel %vm1551, %v1533, 0
    %v1583 = vsel %vm1551, %v1534, 0
    %v1586 = vsel %vm1551, %v1535, 0
    %v1589 = vsel %vm1551, %v1536, 0
    %v1592 = vsel %vm1551, %v1537, 0
    %v1595 = vsel %vm1551, %v1538, 0
    %v1598 = vsel %vm1551, %v1539, 0
    %1600 = vmatprep.subr.mxu0 0.0
    %1601 = vmatpush1.msra.mxu0 %v1540
    %1602 = vmatprep.subr.mxu0 0.0
    %1603 = vmatpush1.msra.mxu0 %v1541
    %1604 = vmatprep.subr.mxu0 0.0
    %1605 = vmatpush1.msra.mxu0 %v1542
    %1606 = vmatprep.subr.mxu0 0.0
    %1607 = vmatpush1.msra.mxu0 %v1543
    %1608 = vmatprep.subr.mxu0 0.0
    %1609 = vmatpush1.msra.mxu0 0.0
    %1610 = vmatprep.subr.mxu0 0.0
    %1611 = vmatpush1.msra.mxu0 0.0
    %1612 = vmatprep.subr.mxu0 0.0
    %1613 = vmatpush1.msra.mxu0 0.0
    %1614 = vmatprep.subr.mxu0 0.0
    %1615 = vmatpush1.msra.mxu0 0.0
    %1616 = vmatprep.subr.mxu0 0.0
    %1617 = vmatpush1.msra.mxu0 0.0
    %1618 = vmatprep.subr.mxu0 0.0
    %1619 = vmatpush1.msra.mxu0 0.0
    %1620 = vmatprep.subr.mxu0 0.0
    %1621 = vmatpush1.msra.mxu0 0.0
    %1622 = vmatprep.subr.mxu0 0.0
    %1623 = vmatpush1.msra.mxu0 0.0
    %1624 = vmatprep.subr.mxu0 0.0
    %1625 = vmatpush1.msra.mxu0 0.0
    %1626 = vmatprep.subr.mxu0 0.0
    %1627 = vmatpush1.msra.mxu0 0.0
    %1628 = vmatprep.subr.mxu0 0.0
    %1629 = vmatpush1.msra.mxu0 0.0
    %1630 = vmatprep.subr.mxu0 0.0
    %1631 = vmatpush1.msra.mxu0 0.0
    %1632 = vmatprep.subr.mxu0 0.0
    %1633 = vmatpush1.msra.mxu0 0.0
    %1634 = vmatprep.subr.mxu0 0.0
    %1635 = vmatpush1.msra.mxu0 0.0
    %1636 = vmatprep.subr.mxu0 0.0
    %1637 = vmatpush1.msra.mxu0 0.0
    %1638 = vmatprep.subr.mxu0 0.0
    %1639 = vmatpush1.msra.mxu0 0.0
    %1640 = vmatprep.subr.mxu0 0.0
    %1641 = vmatpush1.msra.mxu0 0.0
    %1642 = vmatprep.subr.mxu0 0.0
    %1643 = vmatpush1.msra.mxu0 0.0
    %1644 = vmatprep.subr.mxu0 0.0
    %1645 = vmatpush1.msra.mxu0 0.0
    %1646 = vmatprep.subr.mxu0 0.0
    %1647 = vmatpush1.msra.mxu0 0.0
    %1648 = vmatprep.subr.mxu0 0.0
    %1649 = vmatpush1.msra.mxu0 0.0
    %1650 = vmatprep.subr.mxu0 0.0
    %1651 = vmatpush1.msra.mxu0 0.0
    %1652 = vmatprep.subr.mxu0 0.0
    %1653 = vmatpush1.msra.mxu0 0.0
    %1654 = vmatprep.subr.mxu0 0.0
    %1655 = vmatpush1.msra.mxu0 0.0
    %1656 = vmatprep.subr.mxu0 0.0
    %1657 = vmatpush1.msra.mxu0 0.0
    %1658 = vmatprep.subr.mxu0 0.0
    %1659 = vmatpush1.msra.mxu0 0.0
    %1660 = vmatprep.subr.mxu0 0.0
    %1661 = vmatpush1.msra.mxu0 0.0
    %1662 = vmatprep.subr.mxu0 0.0
    %1663 = vmatpush1.msra.mxu0 0.0
    %1664 = vmatprep.mubr.f32.mxu0 0.0
    %1665 = vmatmul.mubr.f32.gmra.mrb[0].mxu0 %v1553
    %v1666 = vpop.f32.mrb[0].mxu0
    %v1667 = vadd.f32 %v1549, %v1666
    %v1668 = vpop.f32.mrb[0].mxu0
    %1669 = vmatprep.mubr.f32.mxu0 0.0
    %1670 = vmatmul.mubr.f32.gmra.mrb[0].mxu0 %v1556
    %v1671 = vpop.f32.mrb[0].mxu0
    %v1672 = vadd.f32 %v1549, %v1671
    %v1673 = vpop.f32.mrb[0].mxu0
    %1674 = vmatprep.mubr.f32.mxu0 0.0
    %1675 = vmatmul.mubr.f32.gmra.mrb[0].mxu0 %v1559
    %v1676 = vpop.f32.mrb[0].mxu0
    %v1677 = vadd.f32 %v1549, %v1676
    %v1678 = vpop.f32.mrb[0].mxu0
    %1679 = vmatprep.mubr.f32.mxu0 0.0
    %1680 = vmatmul.mubr.f32.gmra.mrb[0].mxu0 %v1562
    %v1681 = vpop.f32.mrb[0].mxu0
    %v1682 = vadd.f32 %v1549, %v1681
    %v1683 = vpop.f32.mrb[0].mxu0
    %1684 = vmatprep.mubr.f32.mxu0 0.0
    %1685 = vmatmul.mubr.f32.gmra.mrb[0].mxu0 %v1565
    %v1686 = vpop.f32.mrb[0].mxu0
    %v1687 = vadd.f32 %v1549, %v1686
    %v1688 = vpop.f32.mrb[0].mxu0
    %1689 = vmatprep.mubr.f32.mxu0 0.0
    %1690 = vmatmul.mubr.f32.gmra.mrb[0].mxu0 %v1568
    %v1691 = vpop.f32.mrb[0].mxu0
    %v1692 = vadd.f32 %v1549, %v1691
    %v1693 = vpop.f32.mrb[0].mxu0
    %1694 = vmatprep.mubr.f32.mxu0 0.0
    %1695 = vmatmul.mubr.f32.gmra.mrb[0].mxu0 %v1571
    %v1696 = vpop.f32.mrb[0].mxu0
    %v1697 = vadd.f32 %v1549, %v1696
    %v1698 = vpop.f32.mrb[0].mxu0
    %1699 = vmatprep.mubr.f32.mxu0 0.0
    %1700 = vmatmul.mubr.f32.gmra.mrb[0].mxu0 %v1574
    %v1701 = vpop.f32.mrb[0].mxu0
    %v1702 = vadd.f32 %v1549, %v1701
    %v1703 = vpop.f32.mrb[0].mxu0
    %1704 = vmatprep.mubr.f32.mxu0 0.0
    %1705 = vmatmul.mubr.f32.gmra.mrb[0].mxu0 %v1577
    %v1706 = vpop.f32.mrb[0].mxu0
    %v1707 = vadd.f32 %v1549, %v1706
    %v1708 = vpop.f32.mrb[0].mxu0
    %1709 = vmatprep.mubr.f32.mxu0 0.0
    %1710 = vmatmul.mubr.f32.gmra.mrb[0].mxu0 %v1580
    %v1711 = vpop.f32.mrb[0].mxu0
    %v1712 = vadd.f32 %v1549, %v1711
    %v1713 = vpop.f32.mrb[0].mxu0
    %1714 = vmatprep.mubr.f32.mxu0 0.0
    %1715 = vmatmul.mubr.f32.gmra.mrb[0].mxu0 %v1583
    %v1716 = vpop.f32.mrb[0].mxu0
    %v1717 = vadd.f32 %v1549, %v1716
    %v1718 = vpop.f32.mrb[0].mxu0
    %1719 = vmatprep.mubr.f32.mxu0 0.0
    %1720 = vmatmul.mubr.f32.gmra.mrb[0].mxu0 %v1586
    %v1721 = vpop.f32.mrb[0].mxu0
    %v1722 = vadd.f32 %v1549, %v1721
    %v1723 = vpop.f32.mrb[0].mxu0
    %1724 = vmatprep.mubr.f32.mxu0 0.0
    %1725 = vmatmul.mubr.f32.gmra.mrb[0].mxu0 %v1589
    %v1726 = vpop.f32.mrb[0].mxu0
    %v1727 = vadd.f32 %v1549, %v1726
    %v1728 = vpop.f32.mrb[0].mxu0
    %1729 = vmatprep.mubr.f32.mxu0 0.0
    %1730 = vmatmul.mubr.f32.gmra.mrb[0].mxu0 %v1592
    %v1731 = vpop.f32.mrb[0].mxu0
    %v1732 = vadd.f32 %v1549, %v1731
    %v1733 = vpop.f32.mrb[0].mxu0
    %1734 = vmatprep.mubr.f32.mxu0 0.0
    %1735 = vmatmul.mubr.f32.gmra.mrb[0].mxu0 %v1595
    %v1736 = vpop.f32.mrb[0].mxu0
    %v1737 = vadd.f32 %v1549, %v1736
    %v1738 = vpop.f32.mrb[0].mxu0
    %1739 = vmatprep.mubr.f32.mxu0 0.0
    %1740 = vmatmul.mubr.f32.gmra.mrb[0].mxu0 %v1598
    %v1741 = vpop.f32.mrb[0].mxu0
    %v1742 = vadd.f32 %v1549, %v1741
    %v1743 = vpop.f32.mrb[0].mxu0
    %1744 = vdwg.mxu0
    %v1745 = vadd.f32 %v1667, %v21
    %v1746 = vadd.f32 %v1672, %v22
    %v1747 = vadd.f32 %v1677, %v23
    %v1748 = vadd.f32 %v1682, %v24
    %v1749 = vadd.f32 %v1687, %v25
    %v1750 = vadd.f32 %v1692, %v26
    %v1751 = vadd.f32 %v1697, %v27
    %v1752 = vadd.f32 %v1702, %v28
    %v1753 = vadd.f32 %v1707, %v29
    %v1754 = vadd.f32 %v1712, %v30
    %v1755 = vadd.f32 %v1717, %v31
    %v1756 = vadd.f32 %v1722, %v32
    %v1757 = vadd.f32 %v1727, %v33
    %v1758 = vadd.f32 %v1732, %v34
    %v1759 = vadd.f32 %v1737, %v35
    %v1760 = vadd.f32 %v1742, %v36
    %v1761 = vadd.f32 %v21, %v21
    %v1762 = vadd.f32 %v22, %v22
    %v1763 = vadd.f32 %v23, %v23
    %v1764 = vadd.f32 %v24, %v24
    %v1765 = vadd.f32 %v25, %v25
    %v1766 = vadd.f32 %v26, %v26
    %v1767 = vadd.f32 %v27, %v27
    %v1768 = vadd.f32 %v28, %v28
    %v1769 = vadd.f32 %v29, %v29
    %v1770 = vadd.f32 %v30, %v30
    %v1771 = vadd.f32 %v31, %v31
    %v1772 = vadd.f32 %v32, %v32
    %v1773 = vadd.f32 %v33, %v33
    %v1774 = vadd.f32 %v34, %v34
    %v1775 = vadd.f32 %v35, %v35
    %v1776 = vadd.f32 %v36, %v36
    %v1777 = vsel %vm1551, %v1745, %v1761
    %v1778 = vsel %vm1551, %v1746, %v1762
    %v1779 = vsel %vm1551, %v1747, %v1763
    %v1780 = vsel %vm1551, %v1748, %v1764
    %v1781 = vsel %vm1551, %v1749, %v1765
    %v1782 = vsel %vm1551, %v1750, %v1766
    %v1783 = vsel %vm1551, %v1751, %v1767
    %v1784 = vsel %vm1551, %v1752, %v1768
    %v1785 = vsel %vm1551, %v1753, %v1769
    %v1786 = vsel %vm1551, %v1754, %v1770
    %v1787 = vsel %vm1551, %v1755, %v1771
    %v1788 = vsel %vm1551, %v1756, %v1772
    %v1789 = vsel %vm1551, %v1757, %v1773
    %v1790 = vsel %vm1551, %v1758, %v1774
    %v1791 = vsel %vm1551, %v1759, %v1775
    %v1792 = vsel %vm1551, %v1760, %v1776
    %1793 = vst.msk [vmem:[#allocation2] sm:$0xff] %vm45, %v1777
    %1794 = vst.msk [vmem:[#allocation2 + $0x8] sm:$0xff] %vm45, %v1778
    %1795 = vst.msk [vmem:[#allocation2 + $0x10] sm:$0xff] %vm45, %v1779
    %1796 = vst.msk [vmem:[#allocation2 + $0x18] sm:$0xff] %vm45, %v1780
    %1797 = vst.msk [vmem:[#allocation2 + $0x20] sm:$0xff] %vm45, %v1781
    %1798 = vst.msk [vmem:[#allocation2 + $0x28] sm:$0xff] %vm45, %v1782
    %1799 = vst.msk [vmem:[#allocation2 + $0x30] sm:$0xff] %vm45, %v1783
    %1800 = vst.msk [vmem:[#allocation2 + $0x38] sm:$0xff] %vm45, %v1784
    %1801 = vst.msk [vmem:[#allocation2 + $0x40] sm:$0xff] %vm45, %v1785
    %1802 = vst.msk [vmem:[#allocation2 + $0x48] sm:$0xff] %vm45, %v1786
    %1803 = vst.msk [vmem:[#allocation2 + $0x50] sm:$0xff] %vm45, %v1787
    %1804 = vst.msk [vmem:[#allocation2 + $0x58] sm:$0xff] %vm45, %v1788
    %1805 = vst.msk [vmem:[#allocation2 + $0x60] sm:$0xff] %vm45, %v1789
    %1806 = vst.msk [vmem:[#allocation2 + $0x68] sm:$0xff] %vm45, %v1790
    %1807 = vst.msk [vmem:[#allocation2 + $0x70] sm:$0xff] %vm45, %v1791
    %1808 = vst.msk [vmem:[#allocation2 + $0x78] sm:$0xff] %vm45, %v1792
    // Predicated region
    $region22: #{residual4_forward.1} parent=1 // pred_check
      _
    $region23: #{residual4_forward.1} parent=1 // pred_check_branch
      %1810 = sbr.rel (0) target = $region25
    $region24: #{residual4_forward.1} parent=1 // pred_region
      %s1812 = ssub.s32 2048, 2048
      %1813 = vsyncadd [#allocation3], %s1812
      %s1814 = sshll.u32 [#allocation2], 4
      %s1815 = int_to_ptr.vmem [resolvable:$true] %s1814
      %1820 = dma.vmem_to_hbm [thread:$0]  %s1815, 2048, %s5, [#allocation3], 128, 128, 8
    $region25: #{residual4_forward.1} parent=1 // pred_fallthru
      _
    // Predicated region
    $region26: #{residual4_forward.1} parent=1 // pred_check
      _
    $region27: #{residual4_forward.1} parent=1 // pred_check_branch
      %1822 = sbr.rel (0) target = $region29
    $region28: #{residual4_forward.1} parent=1 // pred_region
      %1823 = dma.done [#allocation3], 2048
    $region29: #{residual4_forward.1} parent=1 // pred_fallthru
      _
    %1824 = vsyncpa [#allocation3], 1

</llo_original>
